<compile_context>
chip_gen: v7x
topology: tpu7x:2x2x1
jax: 0.10.0
libtpu: 0.0.40
codegen_flags: <defaults>
</compile_context>

<pallas_src>
import functools

import jax
import jax.numpy as jnp
from jax.experimental import pallas as pl
from jax.experimental.pallas import tpu as pltpu


def _im2col(x, patch_size):
    """x: (B, C, H, W) -> (B, C*P*P, H*W) zero-padded patch descriptors."""
    B, C, H, W = x.shape
    p = patch_size // 2
    xp = jnp.pad(x, ((0, 0), (0, 0), (p, p), (p, p)))
    cols = []
    for di in range(patch_size):
        for dj in range(patch_size):
            cols.append(xp[:, :, di:di + H, dj:dj + W])
    patches = jnp.stack(cols, axis=2)                      # (B, C, P*P, H, W)
    return patches.reshape(B, C * patch_size * patch_size, H * W)


def _psattn_kernel(q_ref, k_ref, ksq_ref, v_ref, o_ref, m_sc, l_sc, acc_sc,
                   *, inv_T, v_full):
    # q_ref:   (D, tile_q)   query patch descriptors (lane = query pixel)
    # k_ref:   (D, tile_k)   key patch descriptors   (lane = key pixel)
    # ksq_ref: (tile_k, 1)   ||k||^2 per key pixel, f32
    # v_ref:   (n_kb, Cv, tile_k) whole per-batch values   (v_full=True)
    #          (Cv, tile_k)       per-step value tile      (v_full=False)
    # o_ref:   (Cv, tile_q)  lane-dense output block
    # m_sc/l_sc: (1, tile_q) online-softmax running max / denominator
    # acc_sc:    (Cv, tile_q) running weighted-value accumulator
    kv = pl.program_id(2)

    @pl.when(kv == 0)
    def _():
        m_sc[...] = jnp.full_like(m_sc, -jnp.inf)
        l_sc[...] = jnp.zeros_like(l_sc)
        acc_sc[...] = jnp.zeros_like(acc_sc)

    # scores[kpos, q] = (2 q.k - ||k||^2) / T  (||q||^2 cancels in the softmax)
    qk = jax.lax.dot_general(
        k_ref[...], q_ref[...],
        dimension_numbers=(((0,), (0,)), ((), ())),
        preferred_element_type=jnp.float32)                # (tile_k, tile_q)
    s = (2.0 * qk - ksq_ref[...]) * inv_T                  # f32 scale/bias on VPU

    m_prev = m_sc[...]
    m_new = jnp.maximum(m_prev, jnp.max(s, axis=0, keepdims=True))
    alpha = jnp.exp(m_prev - m_new)                        # (1, tile_q)
    p = jnp.exp(s - m_new)                                 # (tile_k, tile_q)

    l_sc[...] = alpha * l_sc[...] + jnp.sum(p, axis=0, keepdims=True)
    v_blk = v_ref[kv] if v_full else v_ref[...]            # (Cv, tile_k), f32
    acc_sc[...] = alpha * acc_sc[...] + jnp.dot(
        v_blk, p, preferred_element_type=jnp.float32)      # (Cv, tile_q)
    m_sc[...] = m_new

    @pl.when(kv == pl.num_programs(2) - 1)
    def _():
        l = l_sc[...]
        inv_l = pl.reciprocal(l, approx=True)              # EUP slot (cheap)
        inv_l = inv_l * (2.0 - l * inv_l)                  # 1 Newton step -> f32
        o_ref[...] = (acc_sc[...] * inv_l).astype(o_ref.dtype)


def ps_attention(q, k, v, *, patch_size=3, T=1.0, tile_q=256, tile_k=512,
                 matmul_dtype=jnp.bfloat16, vmem_limit_bytes=None):
    """q, k: (B, C, Hq, Wq)/(B, C, Hk, Wk);  v: (B, Cv, Hk, Wk).  NCHW in/out."""
    B, C, Hq, Wq = q.shape
    _, _, Hk, Wk = k.shape
    Cv = v.shape[1]
    Nq, Nk = Hq * Wq, Hk * Wk
    D = C * patch_size * patch_size

    tile_q = min(tile_q, Nq)
    tile_k = min(tile_k, Nk)
    assert Nq % tile_q == 0, "Nq must be divisible by the query tile size"
    assert Nk % tile_k == 0, "Nk must be divisible by the key tile size"
    # TODO(synk): non-divisible H*W needs a cdiv grid + masking of the tail
    # key block (otherwise padded keys would receive nonzero softmax weight).

    # Cast before im2col: descriptors are C*P^2 (~9x) bigger than the inputs,
    # so every extra f32 pass over them is expensive.  (B, D, N) layout ->
    # no wrapper transpose and no HBM padding of the descriptor dim.
    q_desc = _im2col(q.astype(matmul_dtype), patch_size)   # (B, D, Nq)
    k_desc = _im2col(k.astype(matmul_dtype), patch_size)   # (B, D, Nk)
    # ||k||^2 stays f32 (separate tiny input); 1/T is applied in-kernel so the
    # softmax-logit bias/scale never round to bf16.
    ksq = jnp.sum(jnp.square(k_desc.astype(jnp.float32)), axis=1)[:, :, None]  # (B, Nk, 1)
    v_flat = v.astype(jnp.float32).reshape(B, Cv, Nk)       # (B, Cv, Nk) lane-dense

    # If the whole per-batch value array is small, keep it resident in VMEM
    # (index_map constant over i, j) and index it per kv step in the kernel:
    # one DMA per batch instead of one tiny DMA per kv step.
    n_kb = Nk // tile_k
    v_full = (Cv * Nk * 4) <= (2 << 20)
    if v_full:
        v_pass = v_flat.reshape(B, Cv, n_kb, tile_k).transpose(0, 2, 1, 3)  # (B, n_kb, Cv, tile_k)
        v_spec = pl.BlockSpec((None, n_kb, Cv, tile_k), lambda b, i, j: (b, 0, 0, 0))
    else:
        v_pass = v_flat
        v_spec = pl.BlockSpec((None, Cv, tile_k), lambda b, i, j: (b, 0, j))

    kernel = functools.partial(_psattn_kernel, inv_T=1.0 / float(T), v_full=v_full)

    out = pl.pallas_call(
        kernel,
        out_shape=jax.ShapeDtypeStruct((B, Cv, Nq), jnp.float32),
        grid_spec=pltpu.PrefetchScalarGridSpec(
            num_scalar_prefetch=0,
            grid=(B, Nq // tile_q, Nk // tile_k),
            in_specs=[
                pl.BlockSpec((None, D, tile_q), lambda b, i, j: (b, 0, i)),
                pl.BlockSpec((None, D, tile_k), lambda b, i, j: (b, 0, j)),
                pl.BlockSpec((None, tile_k, 1), lambda b, i, j: (b, j, 0)),
                v_spec,
            ],
            out_specs=pl.BlockSpec((None, Cv, tile_q), lambda b, i, j: (b, 0, i)),
            scratch_shapes=[
                pltpu.VMEM((1, tile_q), jnp.float32),    # running max
                pltpu.VMEM((1, tile_q), jnp.float32),    # running denominator
                pltpu.VMEM((Cv, tile_q), jnp.float32),   # running weighted sum
            ],
        ),
        compiler_params=pltpu.CompilerParams(
            dimension_semantics=("parallel", "parallel", "arbitrary"),
            vmem_limit_bytes=vmem_limit_bytes),
    )(q_desc, k_desc, ksq, v_pass)

    # (B, Cv, Nq) reshapes directly to NCHW -- no post-kernel transpose.
    return out.reshape(B, Cv, Hq, Wq)


def ps_attention_reference(q, k, v, *, patch_size=3, T=1.0):
    """Pure-JAX f32 reference of the same exhaustive-patchmatch attention."""
    q_desc = _im2col(q.astype(jnp.float32), patch_size)    # (B, D, Nq)
    k_desc = _im2col(k.astype(jnp.float32), patch_size)    # (B, D, Nk)
    B, Cv = v.shape[0], v.shape[1]
    Hq, Wq = q.shape[2], q.shape[3]
    v_flat = v.astype(jnp.float32).reshape(B, Cv, -1)       # (B, Cv, Nk)

    qk = jnp.einsum('bdq,bdk->bqk', q_desc, k_desc)
    qsq = jnp.sum(q_desc * q_desc, axis=1)[:, :, None]
    ksq = jnp.sum(k_desc * k_desc, axis=1)[:, None, :]
    cost = qsq + ksq - 2.0 * qk
    w = jax.nn.softmax(-cost / T, axis=-1)
    out = jnp.einsum('bqk,bck->bcq', w, v_flat)
    return out.reshape(B, Cv, Hq, Wq)


if __name__ == "__main__":
    key = jax.random.PRNGKey(0)
    kq, kk, kv_ = jax.random.split(key, 3)

    B, C, H, W = 2, 4, 16, 16
    Cv = 4
    q = jax.random.normal(kq, (B, C, H, W), dtype=jnp.float32)
    k = jax.random.normal(kk, (B, C, H, W), dtype=jnp.float32)
    v = jax.random.normal(kv_, (B, Cv, H, W), dtype=jnp.float32)

    ref = ps_attention_reference(q, k, v, patch_size=3, T=1.0)

    # f32 descriptor path: tight correctness check against the reference.
    out_f32 = ps_attention(q, k, v, patch_size=3, T=1.0,
                           matmul_dtype=jnp.float32)
    out_f32 = jax.block_until_ready(out_f32)
    assert out_f32.shape == (B, Cv, H, W)
    assert jnp.allclose(out_f32, ref, atol=1e-3, rtol=1e-3), "f32 mismatch"

    # Default path (bf16 descriptors, f32 ksq/softmax/accumulation): looser
    # tolerance reflecting bf16 rounding of the patch descriptors.
    out_bf16 = ps_attention(q, k, v, patch_size=3, T=1.0)
    out_bf16 = jax.block_until_ready(out_bf16)
    assert out_bf16.shape == (B, Cv, H, W)
    assert jnp.allclose(out_bf16, ref, atol=2e-1, rtol=2e-1), "bf16 mismatch"

    print("KERNEL_OK")
</pallas_src>

<mosaic_0001>
module attributes {stable_mosaic.version = 11 : i64} {
  func.func @_psattn_kernel(%arg0: i32, %arg1: i32, %arg2: i32, %arg3: memref<1x36x256xf32, #tpu.memory_space<vmem>>, %arg4: memref<1x36x256xf32, #tpu.memory_space<vmem>>, %arg5: memref<1x256x1xf32, #tpu.memory_space<vmem>>, %arg6: memref<1x1x4x256xf32, #tpu.memory_space<vmem>>, %arg7: memref<1x4x256xf32, #tpu.memory_space<vmem>>, %arg8: memref<1x256xf32, #tpu.memory_space<vmem>>, %arg9: memref<1x256xf32, #tpu.memory_space<vmem>>, %arg10: memref<4x256xf32, #tpu.memory_space<vmem>>) attributes {dimension_semantics = [#tpu.dimension_semantics<parallel>, #tpu.dimension_semantics<parallel>, #tpu.dimension_semantics<arbitrary>], iteration_bounds = array<i64: 2, 1, 1>, scalar_prefetch = 0 : i64, scratch_operands = 3 : i64, tpu.core_type = #tpu.core_type<tc>, window_params = [{transform_indices = @transform_0, window_bounds = array<i64: 1, 36, 256>}, {transform_indices = @transform_1, window_bounds = array<i64: 1, 36, 256>}, {transform_indices = @transform_2, window_bounds = array<i64: 1, 256, 1>}, {transform_indices = @transform_3, window_bounds = array<i64: 1, 1, 4, 256>}, {transform_indices = @transform_4, window_bounds = array<i64: 1, 4, 256>}]} {
    %c0_i32 = arith.constant 0 : i32
    %0 = arith.cmpi eq, %arg2, %c0_i32 : i32
    %1 = arith.extui %0 : i1 to i32
    %c0_i32_0 = arith.constant 0 : i32
    %2 = arith.cmpi ne, %1, %c0_i32_0 : i32
    scf.if %2 {
      %cst_31 = arith.constant 0xFF800000 : f32
      %44 = vector.broadcast %cst_31 : f32 to vector<1x256xf32>
      %c0_32 = arith.constant 0 : index
      %c0_33 = arith.constant 0 : index
      %45 = vector.load %arg8[%c0_32, %c0_33] : memref<1x256xf32, #tpu.memory_space<vmem>>, vector<1x256xf32>
      tpu.vector_store %arg8[%c0_32, %c0_33], %44 {strides = array<i32>} : memref<1x256xf32, #tpu.memory_space<vmem>>, vector<1x256xf32>,
      %cst_34 = arith.constant 0.000000e+00 : f32
      %46 = vector.broadcast %cst_34 : f32 to vector<1x256xf32>
      %c0_35 = arith.constant 0 : index
      %c0_36 = arith.constant 0 : index
      %47 = vector.load %arg9[%c0_35, %c0_36] : memref<1x256xf32, #tpu.memory_space<vmem>>, vector<1x256xf32>
      tpu.vector_store %arg9[%c0_35, %c0_36], %46 {strides = array<i32>} : memref<1x256xf32, #tpu.memory_space<vmem>>, vector<1x256xf32>,
      %cst_37 = arith.constant 0.000000e+00 : f32
      %48 = vector.broadcast %cst_37 : f32 to vector<4x256xf32>
      %c0_38 = arith.constant 0 : index
      %c0_39 = arith.constant 0 : index
      %49 = vector.load %arg10[%c0_38, %c0_39] : memref<4x256xf32, #tpu.memory_space<vmem>>, vector<4x256xf32>
      tpu.vector_store %arg10[%c0_38, %c0_39], %48 {strides = array<i32>} : memref<4x256xf32, #tpu.memory_space<vmem>>, vector<4x256xf32>,
    } else {
    }
    %c0 = arith.constant 0 : index
    %c0_1 = arith.constant 0 : index
    %c0_2 = arith.constant 0 : index
    %3 = vector.load %arg4[%c0, %c0_1, %c0_2] : memref<1x36x256xf32, #tpu.memory_space<vmem>>, vector<1x36x256xf32>
    %4 = vector.shape_cast %3 : vector<1x36x256xf32> to vector<36x256xf32>
    %c0_3 = arith.constant 0 : index
    %c0_4 = arith.constant 0 : index
    %c0_5 = arith.constant 0 : index
    %5 = vector.load %arg3[%c0_3, %c0_4, %c0_5] : memref<1x36x256xf32, #tpu.memory_space<vmem>>, vector<1x36x256xf32>
    %6 = vector.shape_cast %5 : vector<1x36x256xf32> to vector<36x256xf32>
    %cst = arith.constant dense<0.000000e+00> : vector<256x256xf32>
    %7 = tpu.matmul %4, %6, %cst {dimension_numbers = #tpu.dot_dimension_numbers<[0], [0], [1], [1], [0, 1, 1, 1], [], []>} : vector<36x256xf32>, vector<36x256xf32>, vector<256x256xf32> -> vector<256x256xf32>
    %cst_6 = arith.constant 2.000000e+00 : f32
    %8 = vector.broadcast %cst_6 : f32 to vector<256x256xf32>
    %9 = arith.mulf %8, %7 : vector<256x256xf32>
    %c0_7 = arith.constant 0 : index
    %c0_8 = arith.constant 0 : index
    %c0_9 = arith.constant 0 : index
    %10 = vector.load %arg5[%c0_7, %c0_8, %c0_9] : memref<1x256x1xf32, #tpu.memory_space<vmem>>, vector<1x256x1xf32>
    %11 = vector.shape_cast %10 : vector<1x256x1xf32> to vector<256x1xf32>
    %12 = vector.broadcast %11 : vector<256x1xf32> to vector<256x256xf32>
    %13 = arith.subf %9, %12 : vector<256x256xf32>
    %cst_10 = arith.constant 1.000000e+00 : f32
    %14 = vector.broadcast %cst_10 : f32 to vector<256x256xf32>
    %15 = arith.mulf %13, %14 : vector<256x256xf32>
    %c0_11 = arith.constant 0 : index
    %c0_12 = arith.constant 0 : index
    %16 = vector.load %arg8[%c0_11, %c0_12] : memref<1x256xf32, #tpu.memory_space<vmem>>, vector<1x256xf32>
    %cst_13 = arith.constant dense<0xFF800000> : vector<256xf32>
    %17 = vector.multi_reduction <maximumf>, %15, %cst_13 [0] : vector<256x256xf32> to vector<256xf32>
    %18 = vector.shape_cast %17 : vector<256xf32> to vector<1x256xf32>
    %19 = arith.maximumf %16, %18 : vector<1x256xf32>
    %20 = arith.subf %16, %19 : vector<1x256xf32>
    %21 = math.exp %20 : vector<1x256xf32>
    %22 = vector.broadcast %19 : vector<1x256xf32> to vector<256x256xf32>
    %23 = arith.subf %15, %22 : vector<256x256xf32>
    %24 = math.exp %23 : vector<256x256xf32>
    %c0_14 = arith.constant 0 : index
    %c0_15 = arith.constant 0 : index
    %25 = vector.load %arg9[%c0_14, %c0_15] : memref<1x256xf32, #tpu.memory_space<vmem>>, vector<1x256xf32>
    %26 = arith.mulf %21, %25 : vector<1x256xf32>
    %cst_16 = arith.constant dense<0.000000e+00> : vector<256xf32>
    %27 = vector.multi_reduction <add>, %24, %cst_16 [0] : vector<256x256xf32> to vector<256xf32>
    %28 = vector.shape_cast %27 : vector<256xf32> to vector<1x256xf32>
    %29 = arith.addf %26, %28 : vector<1x256xf32>
    %c0_17 = arith.constant 0 : index
    %c0_18 = arith.constant 0 : index
    %30 = vector.load %arg9[%c0_17, %c0_18] : memref<1x256xf32, #tpu.memory_space<vmem>>, vector<1x256xf32>
    tpu.vector_store %arg9[%c0_17, %c0_18], %29 {strides = array<i32>} : memref<1x256xf32, #tpu.memory_space<vmem>>, vector<1x256xf32>,
    %c0_19 = arith.constant 0 : index
    %31 = arith.index_cast %arg2 : i32 to index
    %c0_20 = arith.constant 0 : index
    %c0_21 = arith.constant 0 : index
    %32 = vector.load %arg6[%c0_19, %31, %c0_20, %c0_21] : memref<1x1x4x256xf32, #tpu.memory_space<vmem>>, vector<1x1x4x256xf32>
    %33 = vector.shape_cast %32 : vector<1x1x4x256xf32> to vector<4x256xf32>
    %c0_22 = arith.constant 0 : index
    %c0_23 = arith.constant 0 : index
    %34 = vector.load %arg10[%c0_22, %c0_23] : memref<4x256xf32, #tpu.memory_space<vmem>>, vector<4x256xf32>
    %35 = vector.broadcast %21 : vector<1x256xf32> to vector<4x256xf32>
    %36 = arith.mulf %35, %34 : vector<4x256xf32>
    %cst_24 = arith.constant dense<0.000000e+00> : vector<4x256xf32>
    %37 = tpu.matmul %33, %24, %cst_24 {dimension_numbers = #tpu.dot_dimension_numbers<[1], [0], [0], [1], [0, 0, 1, 1], [], []>} : vector<4x256xf32>, vector<256x256xf32>, vector<4x256xf32> -> vector<4x256xf32>
    %38 = arith.addf %36, %37 : vector<4x256xf32>
    %c0_25 = arith.constant 0 : index
    %c0_26 = arith.constant 0 : index
    %39 = vector.load %arg10[%c0_25, %c0_26] : memref<4x256xf32, #tpu.memory_space<vmem>>, vector<4x256xf32>
    tpu.vector_store %arg10[%c0_25, %c0_26], %38 {strides = array<i32>} : memref<4x256xf32, #tpu.memory_space<vmem>>, vector<4x256xf32>,
    %c0_27 = arith.constant 0 : index
    %c0_28 = arith.constant 0 : index
    %40 = vector.load %arg8[%c0_27, %c0_28] : memref<1x256xf32, #tpu.memory_space<vmem>>, vector<1x256xf32>
    tpu.vector_store %arg8[%c0_27, %c0_28], %19 {strides = array<i32>} : memref<1x256xf32, #tpu.memory_space<vmem>>, vector<1x256xf32>,
    %c0_i32_29 = arith.constant 0 : i32
    %41 = arith.cmpi eq, %arg2, %c0_i32_29 : i32
    %42 = arith.extui %41 : i1 to i32
    %c0_i32_30 = arith.constant 0 : i32
    %43 = arith.cmpi ne, %42, %c0_i32_30 : i32
    scf.if %43 {
      %c0_31 = arith.constant 0 : index
      %c0_32 = arith.constant 0 : index
      %44 = vector.load %arg9[%c0_31, %c0_32] : memref<1x256xf32, #tpu.memory_space<vmem>>, vector<1x256xf32>
      %45 = tpu.reciprocal %44 {approx = true} : vector<1x256xf32> -> vector<1x256xf32>
      %46 = arith.mulf %44, %45 : vector<1x256xf32>
      %cst_33 = arith.constant 2.000000e+00 : f32
      %47 = vector.broadcast %cst_33 : f32 to vector<1x256xf32>
      %48 = arith.subf %47, %46 : vector<1x256xf32>
      %49 = arith.mulf %45, %48 : vector<1x256xf32>
      %c0_34 = arith.constant 0 : index
      %c0_35 = arith.constant 0 : index
      %50 = vector.load %arg10[%c0_34, %c0_35] : memref<4x256xf32, #tpu.memory_space<vmem>>, vector<4x256xf32>
      %51 = vector.broadcast %49 : vector<1x256xf32> to vector<4x256xf32>
      %52 = arith.mulf %50, %51 : vector<4x256xf32>
      %c0_36 = arith.constant 0 : index
      %c0_37 = arith.constant 0 : index
      %c0_38 = arith.constant 0 : index
      %53 = vector.load %arg7[%c0_36, %c0_37, %c0_38] : memref<1x4x256xf32, #tpu.memory_space<vmem>>, vector<1x4x256xf32>
      %54 = vector.shape_cast %53 : vector<1x4x256xf32> to vector<4x256xf32>
      %55 = vector.shape_cast %52 : vector<4x256xf32> to vector<1x4x256xf32>
      tpu.vector_store %arg7[%c0_36, %c0_37, %c0_38], %55 {strides = array<i32>} : memref<1x4x256xf32, #tpu.memory_space<vmem>>, vector<1x4x256xf32>,
    } else {
    }
    return
  }
  func.func @transform_0(%arg0: i32, %arg1: i32, %arg2: i32) -> (i32, i32, i32) {
    %c0_i32 = arith.constant 0 : i32
    %c0_i32_0 = arith.constant 0 : i32
    return %arg0, %c0_i32, %arg1 : i32, i32, i32
  }
  func.func @transform_1(%arg0: i32, %arg1: i32, %arg2: i32) -> (i32, i32, i32) {
    %c0_i32 = arith.constant 0 : i32
    %c0_i32_0 = arith.constant 0 : i32
    return %arg0, %c0_i32, %arg2 : i32, i32, i32
  }
  func.func @transform_2(%arg0: i32, %arg1: i32, %arg2: i32) -> (i32, i32, i32) {
    %c0_i32 = arith.constant 0 : i32
    %c0_i32_0 = arith.constant 0 : i32
    return %arg0, %arg2, %c0_i32 : i32, i32, i32
  }
  func.func @transform_3(%arg0: i32, %arg1: i32, %arg2: i32) -> (i32, i32, i32, i32) {
    %c0_i32 = arith.constant 0 : i32
    %c0_i32_0 = arith.constant 0 : i32
    %c0_i32_1 = arith.constant 0 : i32
    %c0_i32_2 = arith.constant 0 : i32
    return %arg0, %c0_i32, %c0_i32_0, %c0_i32_1 : i32, i32, i32, i32
  }
  func.func @transform_4(%arg0: i32, %arg1: i32, %arg2: i32) -> (i32, i32, i32) {
    %c0_i32 = arith.constant 0 : i32
    %c0_i32_0 = arith.constant 0 : i32
    return %arg0, %c0_i32, %arg1 : i32, i32, i32
  }
}

</mosaic_0001>

<llo_original>
// kernel: tpu_custom_call.1
$region0: #{tpu_custom_call.1}
  #allocation0 [shape = 'u32[]', space=smem, size = 0x4, offset = 0x4, fixed_abs, tag = 'smem constant byte address 0x4 - core index']
  #allocation1 [shape = 'u32[144,128]{1,0:T(1,128)}', space=vmem, size = 0x12000, scoped, tag = 'internal scratch']
  #allocation2 [shape = 'f32[1,256]{1,0:T(1,128)}', space=vmem, size = 0x400, scoped, tag = 'scratch operand']
  #allocation3 [shape = 'f32[1,256]{1,0:T(1,128)}', space=vmem, size = 0x400, scoped, tag = 'scratch operand']
  #allocation4 [shape = 'f32[4,256]{1,0:T(4,128)}', space=vmem, size = 0x1000, scoped, tag = 'scratch operand']
  %s0 = inlined_call_operand.vmem [shape: f32[2,36,256], index: 0, kind: input, shape index: {}]
  %s1 = inlined_call_operand.vmem [shape: f32[2,36,256], index: 1, kind: input, shape index: {}]
  %s2 = inlined_call_operand.vmem [shape: f32[2,256,1], index: 2, kind: input, shape index: {}]
  %s3 = inlined_call_operand.vmem [shape: f32[2,1,4,256], index: 3, kind: input, shape index: {}]
  %s4 = inlined_call_operand.hbm [shape: f32[2,4,256], index: 4, kind: output, shape index: {}]
  %s5 = sld [smem:[#allocation0]]
  $region57: #{tpu_custom_call.1} parent=0
    _
  %s7 = ssub.s32 1, %s5
  %s8 = scalar_select 0, %s7, %s5
  $region1: #{tpu_custom_call.1} parent=0
    #allocation5 [shape = 'u8[8192]{0}', space=vmem, size = 0x2000, scoped, tag = 'output window, operand 0']
    #allocation6 [shape = 's32[2]{0}', space=sflag, size = 0x8, scoped, tag = 'scoped memory for tpu_custom_call.1']
    %9 = vsyncpa [#allocation6], 0
    %s10 = scalar_lea.sflag [#allocation6], 1
    %11 = vsyncpa %s10, 0
    loop: start=0, step=1, limit=4
    $region2: #{tpu_custom_call.1} parent=1 // loop_pre_header
      _
    $region3: #{tpu_custom_call.1} parent=1 // loop_header
      %s13 = sphi 0, %s17
      %p14 = scmp.ge.s32.totalorder %s13, 4
      %s20 = sphi 0, %s39
      %s21 = sphi 0, %s35
      %s22 = sphi 0, %s31
      %s23 = sphi 0, %s20
      %s24 = sphi 0, %s21
      %s25 = sphi 0, %s22
      %s26 = sphi 0, %s23
      %s27 = sphi 0, %s24
      %s28 = sphi 0, %s25
      %s44 = sphi 0, %s46
      %s47 = sphi 0, %s44
      %s48 = sphi 0, %s47
      %s64 = sphi 0, %s48
      %s72 = sphi 0, %s74
      %s75 = sphi 0, %s72
      %s76 = sphi 0, %s75
      %s92 = sphi 0, %s76
      %s100 = sphi 0, %s102
      %s103 = sphi 0, %s100
      %s104 = sphi 0, %s103
      %s120 = sphi 0, %s104
      %s126 = sphi 0, %s128
      %s129 = sphi 0, %s126
      %s130 = sphi 0, %s129
      %s146 = sphi 0, %s130
      %s154 = sphi 0, %s156
      %s157 = sphi 0, %s154
      %s158 = sphi 0, %s157
      %s174 = sphi 0, %s158
    $region4: #{tpu_custom_call.1} parent=1 // loop_header_branch
      %16 = sbr.rel (%p14) target = $region8
    $region5: #{tpu_custom_call.1} parent=1 // loop_body
      %s18 = ssub.s32 %s13, 1
      %s19 = ssub.s32 %s13, 2
      %s29 = sadd.s32 1, %s22
      %p30 = scmp.ge.s32.totalorder %s29, 1
      %s31 = scalar_select %p30, 0, %s29
      %s32 = sadd.s32 1, %s21
      %s33 = scalar_select %p30, %s32, %s21
      %p34 = scmp.ge.s32.totalorder %s33, 1
      %s35 = scalar_select %p34, 0, %s33
      %s36 = sadd.s32 1, %s20
      %s37 = scalar_select %p34, %s36, %s20
      %p38 = scmp.ge.s32.totalorder %s37, 2
      %s39 = scalar_select %p38, 0, %s37
      %s40 = ssub.s32 %s20, %s39
      %s41 = ssub.s32 %s21, %s35
      %s42 = sor.u32 %s40, %s41
      %p43 = scmp.eq.s32.totalorder %s42, 0
      %s45 = sadd.s32 %s44, 1
      %s46 = scalar_select %p43, %s44, %s45
      %p49 = pneg %p43
      %p50 = scmp.eq.s32.totalorder %s13, 1
      %p51 = por %p49, %p50
      %p52 = scmp.ne.s32.totalorder %s44, %s47
      %p53 = scmp.eq.s32.totalorder %s13, 0
      %p54 = por %p52, %p53
      %p55 = scmp.ne.s32.totalorder %s44, %s47
      %p56 = scmp.eq.s32.totalorder %s18, 1
      %p57 = por %p55, %p56
      %p58 = scmp.ne.s32.totalorder %s47, %s48
      %p59 = scmp.eq.s32.totalorder %s18, 0
      %p60 = por %p58, %p59
      %p61 = scmp.ne.s32.totalorder %s47, %s48
      %p62 = scmp.eq.s32.totalorder %s19, 1
      %p63 = por %p61, %p62
      %p65 = scmp.ne.s32.totalorder %s48, %s64
      %p66 = scmp.eq.s32.totalorder %s19, 0
      %p67 = por %p65, %p66
      %s68 = ssub.s32 %s20, %s39
      %s69 = ssub.s32 %s22, %s31
      %s70 = sor.u32 %s68, %s69
      %p71 = scmp.eq.s32.totalorder %s70, 0
      %s73 = sadd.s32 %s72, 1
      %s74 = scalar_select %p71, %s72, %s73
      %p77 = pneg %p71
      %p78 = scmp.eq.s32.totalorder %s13, 1
      %p79 = por %p77, %p78
      %p80 = scmp.ne.s32.totalorder %s72, %s75
      %p81 = scmp.eq.s32.totalorder %s13, 0
      %p82 = por %p80, %p81
      %p83 = scmp.ne.s32.totalorder %s72, %s75
      %p84 = scmp.eq.s32.totalorder %s18, 1
      %p85 = por %p83, %p84
      %p86 = scmp.ne.s32.totalorder %s75, %s76
      %p87 = scmp.eq.s32.totalorder %s18, 0
      %p88 = por %p86, %p87
      %p89 = scmp.ne.s32.totalorder %s75, %s76
      %p90 = scmp.eq.s32.totalorder %s19, 1
      %p91 = por %p89, %p90
      %p93 = scmp.ne.s32.totalorder %s76, %s92
      %p94 = scmp.eq.s32.totalorder %s19, 0
      %p95 = por %p93, %p94
      %s96 = ssub.s32 %s20, %s39
      %s97 = ssub.s32 %s22, %s31
      %s98 = sor.u32 %s96, %s97
      %p99 = scmp.eq.s32.totalorder %s98, 0
      %s101 = sadd.s32 %s100, 1
      %s102 = scalar_select %p99, %s100, %s101
      %p105 = pneg %p99
      %p106 = scmp.eq.s32.totalorder %s13, 1
      %p107 = por %p105, %p106
      %p108 = scmp.ne.s32.totalorder %s100, %s103
      %p109 = scmp.eq.s32.totalorder %s13, 0
      %p110 = por %p108, %p109
      %p111 = scmp.ne.s32.totalorder %s100, %s103
      %p112 = scmp.eq.s32.totalorder %s18, 1
      %p113 = por %p111, %p112
      %p114 = scmp.ne.s32.totalorder %s103, %s104
      %p115 = scmp.eq.s32.totalorder %s18, 0
      %p116 = por %p114, %p115
      %p117 = scmp.ne.s32.totalorder %s103, %s104
      %p118 = scmp.eq.s32.totalorder %s19, 1
      %p119 = por %p117, %p118
      %p121 = scmp.ne.s32.totalorder %s104, %s120
      %p122 = scmp.eq.s32.totalorder %s19, 0
      %p123 = por %p121, %p122
      %s124 = ssub.s32 %s20, %s39
      %p125 = scmp.eq.s32.totalorder %s124, 0
      %s127 = sadd.s32 %s126, 1
      %s128 = scalar_select %p125, %s126, %s127
      %p131 = pneg %p125
      %p132 = scmp.eq.s32.totalorder %s13, 1
      %p133 = por %p131, %p132
      %p134 = scmp.ne.s32.totalorder %s126, %s129
      %p135 = scmp.eq.s32.totalorder %s13, 0
      %p136 = por %p134, %p135
      %p137 = scmp.ne.s32.totalorder %s126, %s129
      %p138 = scmp.eq.s32.totalorder %s18, 1
      %p139 = por %p137, %p138
      %p140 = scmp.ne.s32.totalorder %s129, %s130
      %p141 = scmp.eq.s32.totalorder %s18, 0
      %p142 = por %p140, %p141
      %p143 = scmp.ne.s32.totalorder %s129, %s130
      %p144 = scmp.eq.s32.totalorder %s19, 1
      %p145 = por %p143, %p144
      %p147 = scmp.ne.s32.totalorder %s130, %s146
      %p148 = scmp.eq.s32.totalorder %s19, 0
      %p149 = por %p147, %p148
      %s150 = ssub.s32 %s20, %s39
      %s151 = ssub.s32 %s21, %s35
      %s152 = sor.u32 %s150, %s151
      %p153 = scmp.eq.s32.totalorder %s152, 0
      %s155 = sadd.s32 %s154, 1
      %s156 = scalar_select %p153, %s154, %s155
      %p159 = pneg %p153
      %p160 = scmp.eq.s32.totalorder %s13, 1
      %p161 = por %p159, %p160
      %p162 = scmp.ne.s32.totalorder %s154, %s157
      %p163 = scmp.eq.s32.totalorder %s13, 0
      %p164 = por %p162, %p163
      %p165 = scmp.ne.s32.totalorder %s154, %s157
      %p166 = scmp.eq.s32.totalorder %s18, 1
      %p167 = por %p165, %p166
      %p168 = scmp.ne.s32.totalorder %s157, %s158
      %p169 = scmp.eq.s32.totalorder %s18, 0
      %p170 = por %p168, %p169
      %p171 = scmp.ne.s32.totalorder %s157, %s158
      %p172 = scmp.eq.s32.totalorder %s19, 1
      %p173 = por %p171, %p172
      %p175 = scmp.ne.s32.totalorder %s158, %s174
      %p176 = scmp.eq.s32.totalorder %s19, 0
      %p177 = por %p175, %p176
      %p178 = scmp.le.s32.totalorder 1, %s13
      %p179 = scmp.lt.s32.totalorder %s13, 3
      %p180 = pnand %p178, %p179
      %p181 = pneg %p180
      // Predicated region
      $region9: #{tpu_custom_call.1} parent=5 // pred_check
        _
      $region10: #{tpu_custom_call.1} parent=5 // pred_check_branch
        %183 = sbr.rel (%p180) target = $region12
      $region11: #{tpu_custom_call.1} parent=5 // pred_region
        %s184 = ssub.s32 %s13, 1
      $region12: #{tpu_custom_call.1} parent=5 // pred_fallthru
        _
      %p185 = scmp.lt.s32.totalorder %s13, 2
      // Predicated region
      $region13: #{tpu_custom_call.1} parent=5 // pred_check
        %p186 = pneg %p185
      $region14: #{tpu_custom_call.1} parent=5 // pred_check_branch
        %188 = sbr.rel (%p186) target = $region16
      $region15: #{tpu_custom_call.1} parent=5 // pred_region
        // Predicated region
        $region17: #{tpu_custom_call.1} parent=15 // pred_check
          %p189 = pneg %p54
        $region18: #{tpu_custom_call.1} parent=15 // pred_check_branch
          %191 = sbr.rel (%p189) target = $region20
        $region19: #{tpu_custom_call.1} parent=15 // pred_region
          %s192 = smul.u32 2, %s21
          %p193 = scmp.lt.s32.totalorder %s20, 1
          %s194 = scalar_select %p193, %s20, 1
          %p195 = scmp.lt.s32.totalorder %s192, 1
          %s196 = scalar_select %p195, %s192, 1
          %s197 = smul.addr %s194, 10
          %s198 = sadd.s32 %s196, %s197
          %s199 = smul.addr %s198, 8
          %s200 = scalar_lea.vmem %s0, %s199
          %s201 = smul.u32 2, %s21
        $region20: #{tpu_custom_call.1} parent=15 // pred_fallthru
          _
        // Predicated region
        $region21: #{tpu_custom_call.1} parent=15 // pred_check
          %p202 = pneg %p82
        $region22: #{tpu_custom_call.1} parent=15 // pred_check_branch
          %204 = sbr.rel (%p202) target = $region24
        $region23: #{tpu_custom_call.1} parent=15 // pred_region
          %s205 = smul.u32 2, %s22
          %p206 = scmp.lt.s32.totalorder %s20, 1
          %s207 = scalar_select %p206, %s20, 1
          %p208 = scmp.lt.s32.totalorder %s205, 1
          %s209 = scalar_select %p208, %s205, 1
          %s210 = smul.addr %s207, 10
          %s211 = sadd.s32 %s209, %s210
          %s212 = smul.addr %s211, 8
          %s213 = scalar_lea.vmem %s1, %s212
          %s214 = smul.u32 2, %s22
        $region24: #{tpu_custom_call.1} parent=15 // pred_fallthru
          _
        // Predicated region
        $region25: #{tpu_custom_call.1} parent=15 // pred_check
          %p215 = pneg %p110
        $region26: #{tpu_custom_call.1} parent=15 // pred_check_branch
          %217 = sbr.rel (%p215) target = $region28
        $region27: #{tpu_custom_call.1} parent=15 // pred_region
          %s218 = smul.u32 32, %s22
          %p219 = scmp.lt.s32.totalorder %s20, 1
          %s220 = scalar_select %p219, %s20, 1
          %p221 = scmp.lt.s32.totalorder %s218, 31
          %s222 = scalar_select %p221, %s218, 31
          %s223 = smul.addr %s220, 32
          %s224 = sadd.s32 %s222, %s223
          %s225 = smul.addr %s224, 8
          %s226 = scalar_lea.vmem %s2, %s225
          %s227 = smul.u32 32, %s22
        $region28: #{tpu_custom_call.1} parent=15 // pred_fallthru
          _
        // Predicated region
        $region29: #{tpu_custom_call.1} parent=15 // pred_check
          %p228 = pneg %p136
        $region30: #{tpu_custom_call.1} parent=15 // pred_check_branch
          %230 = sbr.rel (%p228) target = $region32
        $region31: #{tpu_custom_call.1} parent=15 // pred_region
          %p231 = scmp.lt.s32.totalorder %s20, 1
          %s232 = scalar_select %p231, %s20, 1
          %s233 = smul.addr %s232, 2
          %s234 = smul.addr %s233, 4
          %s235 = scalar_lea.vmem %s3, %s234
        $region32: #{tpu_custom_call.1} parent=15 // pred_fallthru
          _
      $region16: #{tpu_custom_call.1} parent=5 // pred_fallthru
        _
      %p236 = scmp.le.s32.totalorder 1, %s13
      %p237 = scmp.lt.s32.totalorder %s13, 3
      %p238 = pnand %p236, %p237
      %p239 = pneg %p238
      // Predicated region
      $region33: #{tpu_custom_call.1} parent=5 // pred_check
        _
      $region34: #{tpu_custom_call.1} parent=5 // pred_check_branch
        %241 = sbr.rel (%p238) target = $region36
      $region35: #{tpu_custom_call.1} parent=5 // pred_region
        %s242 = ssub.s32 %s13, 1
        %s243 = smul.u32 2, %s24
        %p244 = scmp.lt.s32.totalorder %s23, 1
        %s245 = scalar_select %p244, %s23, 1
        %p246 = scmp.lt.s32.totalorder %s243, 1
        %s247 = scalar_select %p246, %s243, 1
        %s248 = smul.addr %s245, 10
        %s249 = sadd.s32 %s247, %s248
        %s250 = smul.addr %s249, 8
        %s251 = scalar_lea.vmem %s0, %s250
        %p252 = pneg %p60
        %p253 = pneg %p57
        %s254 = smul.u32 2, %s25
        %p255 = scmp.lt.s32.totalorder %s23, 1
        %s256 = scalar_select %p255, %s23, 1
        %p257 = scmp.lt.s32.totalorder %s254, 1
        %s258 = scalar_select %p257, %s254, 1
        %s259 = smul.addr %s256, 10
        %s260 = sadd.s32 %s258, %s259
        %s261 = smul.addr %s260, 8
        %s262 = scalar_lea.vmem %s1, %s261
        %p263 = pneg %p88
        %p264 = pneg %p85
        %s265 = smul.u32 32, %s25
        %p266 = scmp.lt.s32.totalorder %s23, 1
        %s267 = scalar_select %p266, %s23, 1
        %p268 = scmp.lt.s32.totalorder %s265, 31
        %s269 = scalar_select %p268, %s265, 31
        %s270 = smul.addr %s267, 32
        %s271 = sadd.s32 %s269, %s270
        %s272 = smul.addr %s271, 8
        %s273 = scalar_lea.vmem %s2, %s272
        %p274 = pneg %p116
        %p275 = pneg %p113
        %p276 = scmp.lt.s32.totalorder %s23, 1
        %s277 = scalar_select %p276, %s23, 1
        %s278 = smul.addr %s277, 2
        %s279 = smul.addr %s278, 4
        %s280 = scalar_lea.vmem %s3, %s279
        %p281 = pneg %p142
        %p282 = pneg %p139
        %p283 = pneg %p170
        %p284 = pneg %p167
        %s285 = sand.u32 %s157, 1
        %s286 = scalar_lea.sflag [#allocation6], %s285
        %s287 = sand.u32 %s157, 1
        %s288 = smul.addr %s287, 8
        %s289 = scalar_lea.vmem [#allocation5], %s288
        %s290 = smul.u32 2, %s24
        %p291 = scmp.lt.s32.totalorder %s23, 1
        %s292 = scalar_select %p291, %s23, 1
        %p293 = scmp.lt.s32.totalorder %s290, 1
        %s294 = scalar_select %p293, %s290, 1
        %s295 = smul.addr %s292, 10
        %s296 = sadd.s32 %s294, %s295
        %s297 = smul.addr %s296, 8
        %s298 = scalar_lea.vmem %s0, %s297
        %s299 = smul.u32 2, %s24
        %s300 = smul.u32 2, %s25
        %p301 = scmp.lt.s32.totalorder %s23, 1
        %s302 = scalar_select %p301, %s23, 1
        %p303 = scmp.lt.s32.totalorder %s300, 1
        %s304 = scalar_select %p303, %s300, 1
        %s305 = smul.addr %s302, 10
        %s306 = sadd.s32 %s304, %s305
        %s307 = smul.addr %s306, 8
        %s308 = scalar_lea.vmem %s1, %s307
        %s309 = smul.u32 2, %s25
        %s310 = smul.u32 32, %s25
        %p311 = scmp.lt.s32.totalorder %s23, 1
        %s312 = scalar_select %p311, %s23, 1
        %p313 = scmp.lt.s32.totalorder %s310, 31
        %s314 = scalar_select %p313, %s310, 31
        %s315 = smul.addr %s312, 32
        %s316 = sadd.s32 %s314, %s315
        %s317 = smul.addr %s316, 8
        %s318 = scalar_lea.vmem %s2, %s317
        %s319 = smul.u32 32, %s25
        %p320 = scmp.lt.s32.totalorder %s23, 1
        %s321 = scalar_select %p320, %s23, 1
        %s322 = smul.addr %s321, 2
        %s323 = smul.addr %s322, 4
        %s324 = scalar_lea.vmem %s3, %s323
        %s325 = smul.u32 2, %s24
        %p326 = scmp.eq.s32.totalorder %s25, 0
        // Predicated region
        $region37: #{tpu_custom_call.1} parent=35 // pred_check
          %p327 = pneg %p326
        $region38: #{tpu_custom_call.1} parent=35 // pred_check_branch
          %329 = sbr.rel (%p327) target = $region40
        $region39: #{tpu_custom_call.1} parent=35 // pred_region
          %v330 = vlaneseq
          %vm331 = vcmp.ge.s32.totalorder %v330, 0
          %vm332 = vcmp.lt.s32.totalorder %v330, 256
          %vm333 = vmand %vm331, %vm332
          %334 = vst.msk [vmem:[#allocation2] sm:$0x3] %vm333, -inf
          %335 = vst.msk [vmem:[#allocation3] sm:$0x3] %vm333, 0.0
          %336 = vst [vmem:[#allocation4] sm:$0xff] 0.0
        $region40: #{tpu_custom_call.1} parent=35 // pred_fallthru
          _
        %v337 = vld [vmem:[%s308] sm:$0xff]
        %v338 = vld [vmem:[%s308 + $0x8] sm:$0xff]
        %v339 = vld [vmem:[%s308 + $0x10] sm:$0xff]
        %v340 = vld [vmem:[%s308 + $0x18] sm:$0xff]
        %v341 = vld [vmem:[%s308 + $0x20] sm:$0xff]
        %v342 = vld [vmem:[%s308 + $0x28] sm:$0xff]
        %v343 = vld [vmem:[%s308 + $0x30] sm:$0xff]
        %v344 = vld [vmem:[%s308 + $0x38] sm:$0xff]
        %v345 = vld [vmem:[%s308 + $0x40] sm:$0xf]
        %v346 = vld [vmem:[%s308 + $0x48] sm:$0xf]
        %v347 = vld [vmem:[%s298] sm:$0xff]
        %v348 = vld [vmem:[%s298 + $0x8] sm:$0xff]
        %v349 = vld [vmem:[%s298 + $0x10] sm:$0xff]
        %v350 = vld [vmem:[%s298 + $0x18] sm:$0xff]
        %v351 = vld [vmem:[%s298 + $0x20] sm:$0xff]
        %v352 = vld [vmem:[%s298 + $0x28] sm:$0xff]
        %v353 = vld [vmem:[%s298 + $0x30] sm:$0xff]
        %v354 = vld [vmem:[%s298 + $0x38] sm:$0xff]
        %v355 = vld [vmem:[%s298 + $0x40] sm:$0xf]
        %v356 = vld [vmem:[%s298 + $0x48] sm:$0xf]
        %357 = vxpose.xlu0.b32.start [1/16] %v337, 128
        %358 = vxpose.xlu0.b32.cont [2/16] %v339, 128
        %359 = vxpose.xlu0.b32.cont [3/16] %v341, 128
        %360 = vxpose.xlu0.b32.cont [4/16] %v343, 128
        %361 = vxpose.xlu0.b32.cont [5/16] %v345, 128
        %362 = vxpose.xlu0.b32.cont [6/16] 0.0, 128
        %363 = vxpose.xlu0.b32.cont [7/16] 0.0, 128
        %364 = vxpose.xlu0.b32.cont [8/16] 0.0, 128
        %365 = vxpose.xlu0.b32.cont [9/16] 0.0, 128
        %366 = vxpose.xlu0.b32.cont [10/16] 0.0, 128
        %367 = vxpose.xlu0.b32.cont [11/16] 0.0, 128
        %368 = vxpose.xlu0.b32.cont [12/16] 0.0, 128
        %369 = vxpose.xlu0.b32.cont [13/16] 0.0, 128
        %370 = vxpose.xlu0.b32.cont [14/16] 0.0, 128
        %371 = vxpose.xlu0.b32.cont [15/16] 0.0, 128
        %372 = vxpose.xlu0.b32.end [16/16] 0.0, 128
        %v373 = vpop.trf.xlu0
        %v374 = vpop.trf.xlu0
        %v375 = vpop.trf.xlu0
        %v376 = vpop.trf.xlu0
        %v377 = vpop.trf.xlu0
        %v378 = vpop.trf.xlu0
        %v379 = vpop.trf.xlu0
        %v380 = vpop.trf.xlu0
        %v381 = vpop.trf.xlu0
        %v382 = vpop.trf.xlu0
        %v383 = vpop.trf.xlu0
        %v384 = vpop.trf.xlu0
        %v385 = vpop.trf.xlu0
        %v386 = vpop.trf.xlu0
        %v387 = vpop.trf.xlu0
        %v388 = vpop.trf.xlu0
        %389 = vxpose.xlu0.b32.start [1/16] %v338, 128
        %390 = vxpose.xlu0.b32.cont [2/16] %v340, 128
        %391 = vxpose.xlu0.b32.cont [3/16] %v342, 128
        %392 = vxpose.xlu0.b32.cont [4/16] %v344, 128
        %393 = vxpose.xlu0.b32.cont [5/16] %v346, 128
        %394 = vxpose.xlu0.b32.cont [6/16] 0.0, 128
        %395 = vxpose.xlu0.b32.cont [7/16] 0.0, 128
        %396 = vxpose.xlu0.b32.cont [8/16] 0.0, 128
        %397 = vxpose.xlu0.b32.cont [9/16] 0.0, 128
        %398 = vxpose.xlu0.b32.cont [10/16] 0.0, 128
        %399 = vxpose.xlu0.b32.cont [11/16] 0.0, 128
        %400 = vxpose.xlu0.b32.cont [12/16] 0.0, 128
        %401 = vxpose.xlu0.b32.cont [13/16] 0.0, 128
        %402 = vxpose.xlu0.b32.cont [14/16] 0.0, 128
        %403 = vxpose.xlu0.b32.cont [15/16] 0.0, 128
        %404 = vxpose.xlu0.b32.end [16/16] 0.0, 128
        %v405 = vpop.trf.xlu0
        %v406 = vpop.trf.xlu0
        %v407 = vpop.trf.xlu0
        %v408 = vpop.trf.xlu0
        %v409 = vpop.trf.xlu0
        %v410 = vpop.trf.xlu0
        %v411 = vpop.trf.xlu0
        %v412 = vpop.trf.xlu0
        %v413 = vpop.trf.xlu0
        %v414 = vpop.trf.xlu0
        %v415 = vpop.trf.xlu0
        %v416 = vpop.trf.xlu0
        %v417 = vpop.trf.xlu0
        %v418 = vpop.trf.xlu0
        %v419 = vpop.trf.xlu0
        %v420 = vpop.trf.xlu0
        %vm421 = vcmask 293888
        %v423 = vsel %vm421, %v373, 0
        %v426 = vsel %vm421, %v374, 0
        %v429 = vsel %vm421, %v375, 0
        %v432 = vsel %vm421, %v376, 0
        %v435 = vsel %vm421, %v377, 0
        %v438 = vsel %vm421, %v378, 0
        %v441 = vsel %vm421, %v379, 0
        %v444 = vsel %vm421, %v380, 0
        %v447 = vsel %vm421, %v381, 0
        %v450 = vsel %vm421, %v382, 0
        %v453 = vsel %vm421, %v383, 0
        %v456 = vsel %vm421, %v384, 0
        %v459 = vsel %vm421, %v385, 0
        %v462 = vsel %vm421, %v386, 0
        %v465 = vsel %vm421, %v387, 0
        %v468 = vsel %vm421, %v388, 0
        %v471 = vsel %vm421, %v405, 0
        %v474 = vsel %vm421, %v406, 0
        %v477 = vsel %vm421, %v407, 0
        %v480 = vsel %vm421, %v408, 0
        %v483 = vsel %vm421, %v409, 0
        %v486 = vsel %vm421, %v410, 0
        %v489 = vsel %vm421, %v411, 0
        %v492 = vsel %vm421, %v412, 0
        %v495 = vsel %vm421, %v413, 0
        %v498 = vsel %vm421, %v414, 0
        %v501 = vsel %vm421, %v415, 0
        %v504 = vsel %vm421, %v416, 0
        %v507 = vsel %vm421, %v417, 0
        %v510 = vsel %vm421, %v418, 0
        %v513 = vsel %vm421, %v419, 0
        %v516 = vsel %vm421, %v420, 0
        %vm518 = vcmask 1043456
        %v520 = vsel %vm518, %v355, 0
        %v523 = vsel %vm518, %v356, 0
        %525 = vmatprep.subr.mxu0 %v348
        %526 = vmatpush1.msra.mxu0 %v347
        %527 = vmatprep.subr.mxu0 %v350
        %528 = vmatpush1.msra.mxu0 %v349
        %529 = vmatprep.subr.mxu0 %v352
        %530 = vmatpush1.msra.mxu0 %v351
        %531 = vmatprep.subr.mxu0 %v354
        %532 = vmatpush1.msra.mxu0 %v353
        %533 = vmatprep.subr.mxu0 %v523
        %534 = vmatpush1.msra.mxu0 %v520
        %535 = vmatprep.subr.mxu0 0.0
        %536 = vmatpush1.msra.mxu0 0.0
        %537 = vmatprep.subr.mxu0 0.0
        %538 = vmatpush1.msra.mxu0 0.0
        %539 = vmatprep.subr.mxu0 0.0
        %540 = vmatpush1.msra.mxu0 0.0
        %541 = vmatprep.subr.mxu0 0.0
        %542 = vmatpush1.msra.mxu0 0.0
        %543 = vmatprep.subr.mxu0 0.0
        %544 = vmatpush1.msra.mxu0 0.0
        %545 = vmatprep.subr.mxu0 0.0
        %546 = vmatpush1.msra.mxu0 0.0
        %547 = vmatprep.subr.mxu0 0.0
        %548 = vmatpush1.msra.mxu0 0.0
        %549 = vmatprep.subr.mxu0 0.0
        %550 = vmatpush1.msra.mxu0 0.0
        %551 = vmatprep.subr.mxu0 0.0
        %552 = vmatpush1.msra.mxu0 0.0
        %553 = vmatprep.subr.mxu0 0.0
        %554 = vmatpush1.msra.mxu0 0.0
        %555 = vmatprep.subr.mxu0 0.0
        %556 = vmatpush1.msra.mxu0 0.0
        %557 = vmatprep.subr.mxu0 0.0
        %558 = vmatpush1.msra.mxu0 0.0
        %559 = vmatprep.subr.mxu0 0.0
        %560 = vmatpush1.msra.mxu0 0.0
        %561 = vmatprep.subr.mxu0 0.0
        %562 = vmatpush1.msra.mxu0 0.0
        %563 = vmatprep.subr.mxu0 0.0
        %564 = vmatpush1.msra.mxu0 0.0
        %565 = vmatprep.subr.mxu0 0.0
        %566 = vmatpush1.msra.mxu0 0.0
        %567 = vmatprep.subr.mxu0 0.0
        %568 = vmatpush1.msra.mxu0 0.0
        %569 = vmatprep.subr.mxu0 0.0
        %570 = vmatpush1.msra.mxu0 0.0
        %571 = vmatprep.subr.mxu0 0.0
        %572 = vmatpush1.msra.mxu0 0.0
        %573 = vmatprep.subr.mxu0 0.0
        %574 = vmatpush1.msra.mxu0 0.0
        %575 = vmatprep.subr.mxu0 0.0
        %576 = vmatpush1.msra.mxu0 0.0
        %577 = vmatprep.subr.mxu0 0.0
        %578 = vmatpush1.msra.mxu0 0.0
        %579 = vmatprep.subr.mxu0 0.0
        %580 = vmatpush1.msra.mxu0 0.0
        %581 = vmatprep.subr.mxu0 0.0
        %582 = vmatpush1.msra.mxu0 0.0
        %583 = vmatprep.subr.mxu0 0.0
        %584 = vmatpush1.msra.mxu0 0.0
        %585 = vmatprep.subr.mxu0 0.0
        %586 = vmatpush1.msra.mxu0 0.0
        %587 = vmatprep.subr.mxu0 0.0
        %588 = vmatpush1.msra.mxu0 0.0
        %589 = vmatprep.mubr.f32.mxu0 0.0
        %590 = vmatmul.mubr.f32.gmra.mrb[0].mxu0 %v423
        %v591 = vpop.f32.mrb[0].mxu0
        %v592 = vadd.f32 0.0, %v591
        %v593 = vpop.f32.mrb[0].mxu0
        %v594 = vadd.f32 0.0, %v593
        %595 = vmatprep.mubr.f32.mxu0 0.0
        %596 = vmatmul.mubr.f32.gmra.mrb[0].mxu0 %v426
        %v597 = vpop.f32.mrb[0].mxu0
        %v598 = vadd.f32 0.0, %v597
        %v599 = vpop.f32.mrb[0].mxu0
        %v600 = vadd.f32 0.0, %v599
        %601 = vmatprep.mubr.f32.mxu0 0.0
        %602 = vmatmul.mubr.f32.gmra.mrb[0].mxu0 %v429
        %v603 = vpop.f32.mrb[0].mxu0
        %v604 = vadd.f32 0.0, %v603
        %v605 = vpop.f32.mrb[0].mxu0
        %v606 = vadd.f32 0.0, %v605
        %607 = vmatprep.mubr.f32.mxu0 0.0
        %608 = vmatmul.mubr.f32.gmra.mrb[0].mxu0 %v432
        %v609 = vpop.f32.mrb[0].mxu0
        %v610 = vadd.f32 0.0, %v609
        %v611 = vpop.f32.mrb[0].mxu0
        %v612 = vadd.f32 0.0, %v611
        %613 = vmatprep.mubr.f32.mxu0 0.0
        %614 = vmatmul.mubr.f32.gmra.mrb[0].mxu0 %v435
        %v615 = vpop.f32.mrb[0].mxu0
        %v616 = vadd.f32 0.0, %v615
        %v617 = vpop.f32.mrb[0].mxu0
        %v618 = vadd.f32 0.0, %v617
        %619 = vmatprep.mubr.f32.mxu0 0.0
        %620 = vmatmul.mubr.f32.gmra.mrb[0].mxu0 %v438
        %v621 = vpop.f32.mrb[0].mxu0
        %v622 = vadd.f32 0.0, %v621
        %v623 = vpop.f32.mrb[0].mxu0
        %v624 = vadd.f32 0.0, %v623
        %625 = vmatprep.mubr.f32.mxu0 0.0
        %626 = vmatmul.mubr.f32.gmra.mrb[0].mxu0 %v441
        %v627 = vpop.f32.mrb[0].mxu0
        %v628 = vadd.f32 0.0, %v627
        %v629 = vpop.f32.mrb[0].mxu0
        %v630 = vadd.f32 0.0, %v629
        %631 = vmatprep.mubr.f32.mxu0 0.0
        %632 = vmatmul.mubr.f32.gmra.mrb[0].mxu0 %v444
        %v633 = vpop.f32.mrb[0].mxu0
        %v634 = vadd.f32 0.0, %v633
        %v635 = vpop.f32.mrb[0].mxu0
        %v636 = vadd.f32 0.0, %v635
        %637 = vmatprep.mubr.f32.mxu0 0.0
        %638 = vmatmul.mubr.f32.gmra.mrb[0].mxu0 %v447
        %v639 = vpop.f32.mrb[0].mxu0
        %v640 = vadd.f32 0.0, %v639
        %v641 = vpop.f32.mrb[0].mxu0
        %v642 = vadd.f32 0.0, %v641
        %643 = vmatprep.mubr.f32.mxu0 0.0
        %644 = vmatmul.mubr.f32.gmra.mrb[0].mxu0 %v450
        %v645 = vpop.f32.mrb[0].mxu0
        %v646 = vadd.f32 0.0, %v645
        %v647 = vpop.f32.mrb[0].mxu0
        %v648 = vadd.f32 0.0, %v647
        %649 = vmatprep.mubr.f32.mxu0 0.0
        %650 = vmatmul.mubr.f32.gmra.mrb[0].mxu0 %v453
        %v651 = vpop.f32.mrb[0].mxu0
        %v652 = vadd.f32 0.0, %v651
        %v653 = vpop.f32.mrb[0].mxu0
        %v654 = vadd.f32 0.0, %v653
        %655 = vmatprep.mubr.f32.mxu0 0.0
        %656 = vmatmul.mubr.f32.gmra.mrb[0].mxu0 %v456
        %v657 = vpop.f32.mrb[0].mxu0
        %v658 = vadd.f32 0.0, %v657
        %v659 = vpop.f32.mrb[0].mxu0
        %v660 = vadd.f32 0.0, %v659
        %661 = vmatprep.mubr.f32.mxu0 0.0
        %662 = vmatmul.mubr.f32.gmra.mrb[0].mxu0 %v459
        %v663 = vpop.f32.mrb[0].mxu0
        %v664 = vadd.f32 0.0, %v663
        %v665 = vpop.f32.mrb[0].mxu0
        %v666 = vadd.f32 0.0, %v665
        %667 = vmatprep.mubr.f32.mxu0 0.0
        %668 = vmatmul.mubr.f32.gmra.mrb[0].mxu0 %v462
        %v669 = vpop.f32.mrb[0].mxu0
        %v670 = vadd.f32 0.0, %v669
        %v671 = vpop.f32.mrb[0].mxu0
        %v672 = vadd.f32 0.0, %v671
        %673 = vmatprep.mubr.f32.mxu0 0.0
        %674 = vmatmul.mubr.f32.gmra.mrb[0].mxu0 %v465
        %v675 = vpop.f32.mrb[0].mxu0
        %v676 = vadd.f32 0.0, %v675
        %v677 = vpop.f32.mrb[0].mxu0
        %v678 = vadd.f32 0.0, %v677
        %679 = vmatprep.mubr.f32.mxu0 0.0
        %680 = vmatmul.mubr.f32.gmra.mrb[0].mxu0 %v468
        %v681 = vpop.f32.mrb[0].mxu0
        %v682 = vadd.f32 0.0, %v681
        %v683 = vpop.f32.mrb[0].mxu0
        %v684 = vadd.f32 0.0, %v683
        %685 = vmatprep.mubr.f32.mxu0 0.0
        %686 = vmatmul.mubr.f32.gmra.mrb[0].mxu0 %v471
        %v687 = vpop.f32.mrb[0].mxu0
        %v688 = vadd.f32 0.0, %v687
        %v689 = vpop.f32.mrb[0].mxu0
        %v690 = vadd.f32 0.0, %v689
        %691 = vmatprep.mubr.f32.mxu0 0.0
        %692 = vmatmul.mubr.f32.gmra.mrb[0].mxu0 %v474
        %v693 = vpop.f32.mrb[0].mxu0
        %v694 = vadd.f32 0.0, %v693
        %v695 = vpop.f32.mrb[0].mxu0
        %v696 = vadd.f32 0.0, %v695
        %697 = vmatprep.mubr.f32.mxu0 0.0
        %698 = vmatmul.mubr.f32.gmra.mrb[0].mxu0 %v477
        %v699 = vpop.f32.mrb[0].mxu0
        %v700 = vadd.f32 0.0, %v699
        %v701 = vpop.f32.mrb[0].mxu0
        %v702 = vadd.f32 0.0, %v701
        %703 = vmatprep.mubr.f32.mxu0 0.0
        %704 = vmatmul.mubr.f32.gmra.mrb[0].mxu0 %v480
        %v705 = vpop.f32.mrb[0].mxu0
        %v706 = vadd.f32 0.0, %v705
        %v707 = vpop.f32.mrb[0].mxu0
        %v708 = vadd.f32 0.0, %v707
        %709 = vmatprep.mubr.f32.mxu0 0.0
        %710 = vmatmul.mubr.f32.gmra.mrb[0].mxu0 %v483
        %v711 = vpop.f32.mrb[0].mxu0
        %v712 = vadd.f32 0.0, %v711
        %v713 = vpop.f32.mrb[0].mxu0
        %v714 = vadd.f32 0.0, %v713
        %715 = vmatprep.mubr.f32.mxu0 0.0
        %716 = vmatmul.mubr.f32.gmra.mrb[0].mxu0 %v486
        %v717 = vpop.f32.mrb[0].mxu0
        %v718 = vadd.f32 0.0, %v717
        %v719 = vpop.f32.mrb[0].mxu0
        %v720 = vadd.f32 0.0, %v719
        %721 = vmatprep.mubr.f32.mxu0 0.0
        %722 = vmatmul.mubr.f32.gmra.mrb[0].mxu0 %v489
        %v723 = vpop.f32.mrb[0].mxu0
        %v724 = vadd.f32 0.0, %v723
        %v725 = vpop.f32.mrb[0].mxu0
        %v726 = vadd.f32 0.0, %v725
        %727 = vmatprep.mubr.f32.mxu0 0.0
        %728 = vmatmul.mubr.f32.gmra.mrb[0].mxu0 %v492
        %v729 = vpop.f32.mrb[0].mxu0
        %v730 = vadd.f32 0.0, %v729
        %v731 = vpop.f32.mrb[0].mxu0
        %v732 = vadd.f32 0.0, %v731
        %733 = vmatprep.mubr.f32.mxu0 0.0
        %734 = vmatmul.mubr.f32.gmra.mrb[0].mxu0 %v495
        %v735 = vpop.f32.mrb[0].mxu0
        %v736 = vadd.f32 0.0, %v735
        %v737 = vpop.f32.mrb[0].mxu0
        %v738 = vadd.f32 0.0, %v737
        %739 = vmatprep.mubr.f32.mxu0 0.0
        %740 = vmatmul.mubr.f32.gmra.mrb[0].mxu0 %v498
        %v741 = vpop.f32.mrb[0].mxu0
        %v742 = vadd.f32 0.0, %v741
        %v743 = vpop.f32.mrb[0].mxu0
        %v744 = vadd.f32 0.0, %v743
        %745 = vmatprep.mubr.f32.mxu0 0.0
        %746 = vmatmul.mubr.f32.gmra.mrb[0].mxu0 %v501
        %v747 = vpop.f32.mrb[0].mxu0
        %v748 = vadd.f32 0.0, %v747
        %v749 = vpop.f32.mrb[0].mxu0
        %v750 = vadd.f32 0.0, %v749
        %751 = vmatprep.mubr.f32.mxu0 0.0
        %752 = vmatmul.mubr.f32.gmra.mrb[0].mxu0 %v504
        %v753 = vpop.f32.mrb[0].mxu0
        %v754 = vadd.f32 0.0, %v753
        %v755 = vpop.f32.mrb[0].mxu0
        %v756 = vadd.f32 0.0, %v755
        %757 = vmatprep.mubr.f32.mxu0 0.0
        %758 = vmatmul.mubr.f32.gmra.mrb[0].mxu0 %v507
        %v759 = vpop.f32.mrb[0].mxu0
        %v760 = vadd.f32 0.0, %v759
        %v761 = vpop.f32.mrb[0].mxu0
        %v762 = vadd.f32 0.0, %v761
        %763 = vmatprep.mubr.f32.mxu0 0.0
        %764 = vmatmul.mubr.f32.gmra.mrb[0].mxu0 %v510
        %v765 = vpop.f32.mrb[0].mxu0
        %v766 = vadd.f32 0.0, %v765
        %v767 = vpop.f32.mrb[0].mxu0
        %v768 = vadd.f32 0.0, %v767
        %769 = vmatprep.mubr.f32.mxu0 0.0
        %770 = vmatmul.mubr.f32.gmra.mrb[0].mxu0 %v513
        %v771 = vpop.f32.mrb[0].mxu0
        %v772 = vadd.f32 0.0, %v771
        %v773 = vpop.f32.mrb[0].mxu0
        %v774 = vadd.f32 0.0, %v773
        %775 = vmatprep.mubr.f32.mxu0 0.0
        %776 = vmatmul.mubr.f32.gmra.mrb[0].mxu0 %v516
        %v777 = vpop.f32.mrb[0].mxu0
        %v778 = vadd.f32 0.0, %v777
        %v779 = vpop.f32.mrb[0].mxu0
        %v780 = vadd.f32 0.0, %v779
        %781 = vdwg.mxu0
        %v782 = vmul.f32 %v592, 2.0
        %v783 = vmul.f32 %v594, 2.0
        %v784 = vmul.f32 %v598, 2.0
        %v785 = vmul.f32 %v600, 2.0
        %v786 = vmul.f32 %v604, 2.0
        %v787 = vmul.f32 %v606, 2.0
        %v788 = vmul.f32 %v610, 2.0
        %v789 = vmul.f32 %v612, 2.0
        %v790 = vmul.f32 %v616, 2.0
        %v791 = vmul.f32 %v618, 2.0
        %v792 = vmul.f32 %v622, 2.0
        %v793 = vmul.f32 %v624, 2.0
        %v794 = vmul.f32 %v628, 2.0
        %v795 = vmul.f32 %v630, 2.0
        %v796 = vmul.f32 %v634, 2.0
        %v797 = vmul.f32 %v636, 2.0
        %v798 = vmul.f32 %v640, 2.0
        %v799 = vmul.f32 %v642, 2.0
        %v800 = vmul.f32 %v646, 2.0
        %v801 = vmul.f32 %v648, 2.0
        %v802 = vmul.f32 %v652, 2.0
        %v803 = vmul.f32 %v654, 2.0
        %v804 = vmul.f32 %v658, 2.0
        %v805 = vmul.f32 %v660, 2.0
        %v806 = vmul.f32 %v664, 2.0
        %v807 = vmul.f32 %v666, 2.0
        %v808 = vmul.f32 %v670, 2.0
        %v809 = vmul.f32 %v672, 2.0
        %v810 = vmul.f32 %v676, 2.0
        %v811 = vmul.f32 %v678, 2.0
        %v812 = vmul.f32 %v682, 2.0
        %v813 = vmul.f32 %v684, 2.0
        %v814 = vmul.f32 %v688, 2.0
        %v815 = vmul.f32 %v690, 2.0
        %v816 = vmul.f32 %v694, 2.0
        %v817 = vmul.f32 %v696, 2.0
        %v818 = vmul.f32 %v700, 2.0
        %v819 = vmul.f32 %v702, 2.0
        %v820 = vmul.f32 %v706, 2.0
        %v821 = vmul.f32 %v708, 2.0
        %v822 = vmul.f32 %v712, 2.0
        %v823 = vmul.f32 %v714, 2.0
        %v824 = vmul.f32 %v718, 2.0
        %v825 = vmul.f32 %v720, 2.0
        %v826 = vmul.f32 %v724, 2.0
        %v827 = vmul.f32 %v726, 2.0
        %v828 = vmul.f32 %v730, 2.0
        %v829 = vmul.f32 %v732, 2.0
        %v830 = vmul.f32 %v736, 2.0
        %v831 = vmul.f32 %v738, 2.0
        %v832 = vmul.f32 %v742, 2.0
        %v833 = vmul.f32 %v744, 2.0
        %v834 = vmul.f32 %v748, 2.0
        %v835 = vmul.f32 %v750, 2.0
        %v836 = vmul.f32 %v754, 2.0
        %v837 = vmul.f32 %v756, 2.0
        %v838 = vmul.f32 %v760, 2.0
        %v839 = vmul.f32 %v762, 2.0
        %v840 = vmul.f32 %v766, 2.0
        %v841 = vmul.f32 %v768, 2.0
        %v842 = vmul.f32 %v772, 2.0
        %v843 = vmul.f32 %v774, 2.0
        %v844 = vmul.f32 %v778, 2.0
        %v845 = vmul.f32 %v780, 2.0
        %v846 = vld [vmem:[%s318] sm:$0xff]
        %v847 = vld [vmem:[%s318 + $0x8] sm:$0xff]
        %v848 = vld [vmem:[%s318 + $0x10] sm:$0xff]
        %v849 = vld [vmem:[%s318 + $0x18] sm:$0xff]
        %v850 = vld [vmem:[%s318 + $0x20] sm:$0xff]
        %v851 = vld [vmem:[%s318 + $0x28] sm:$0xff]
        %v852 = vld [vmem:[%s318 + $0x30] sm:$0xff]
        %v853 = vld [vmem:[%s318 + $0x38] sm:$0xff]
        %v854 = vld [vmem:[%s318 + $0x40] sm:$0xff]
        %v855 = vld [vmem:[%s318 + $0x48] sm:$0xff]
        %v856 = vld [vmem:[%s318 + $0x50] sm:$0xff]
        %v857 = vld [vmem:[%s318 + $0x58] sm:$0xff]
        %v858 = vld [vmem:[%s318 + $0x60] sm:$0xff]
        %v859 = vld [vmem:[%s318 + $0x68] sm:$0xff]
        %v860 = vld [vmem:[%s318 + $0x70] sm:$0xff]
        %v861 = vld [vmem:[%s318 + $0x78] sm:$0xff]
        %v862 = vld [vmem:[%s318 + $0x80] sm:$0xff]
        %v863 = vld [vmem:[%s318 + $0x88] sm:$0xff]
        %v864 = vld [vmem:[%s318 + $0x90] sm:$0xff]
        %v865 = vld [vmem:[%s318 + $0x98] sm:$0xff]
        %v866 = vld [vmem:[%s318 + $0xa0] sm:$0xff]
        %v867 = vld [vmem:[%s318 + $0xa8] sm:$0xff]
        %v868 = vld [vmem:[%s318 + $0xb0] sm:$0xff]
        %v869 = vld [vmem:[%s318 + $0xb8] sm:$0xff]
        %v870 = vld [vmem:[%s318 + $0xc0] sm:$0xff]
        %v871 = vld [vmem:[%s318 + $0xc8] sm:$0xff]
        %v872 = vld [vmem:[%s318 + $0xd0] sm:$0xff]
        %v873 = vld [vmem:[%s318 + $0xd8] sm:$0xff]
        %v874 = vld [vmem:[%s318 + $0xe0] sm:$0xff]
        %v875 = vld [vmem:[%s318 + $0xe8] sm:$0xff]
        %v876 = vld [vmem:[%s318 + $0xf0] sm:$0xff]
        %v877 = vld [vmem:[%s318 + $0xf8] sm:$0xff]
        %879 = vset.pattern.permute.xlu0 0
        %880 = vperm.xlu0 %879, %v846
        %v881 = vpop.permute.xlu0 %880
        %884 = vset.pattern.permute.xlu0 0
        %885 = vperm.xlu0 %884, %v847
        %v886 = vpop.permute.xlu0 %885
        %889 = vset.pattern.permute.xlu0 0
        %890 = vperm.xlu0 %889, %v848
        %v891 = vpop.permute.xlu0 %890
        %894 = vset.pattern.permute.xlu0 0
        %895 = vperm.xlu0 %894, %v849
        %v896 = vpop.permute.xlu0 %895
        %899 = vset.pattern.permute.xlu0 0
        %900 = vperm.xlu0 %899, %v850
        %v901 = vpop.permute.xlu0 %900
        %904 = vset.pattern.permute.xlu0 0
        %905 = vperm.xlu0 %904, %v851
        %v906 = vpop.permute.xlu0 %905
        %909 = vset.pattern.permute.xlu0 0
        %910 = vperm.xlu0 %909, %v852
        %v911 = vpop.permute.xlu0 %910
        %914 = vset.pattern.permute.xlu0 0
        %915 = vperm.xlu0 %914, %v853
        %v916 = vpop.permute.xlu0 %915
        %919 = vset.pattern.permute.xlu0 0
        %920 = vperm.xlu0 %919, %v854
        %v921 = vpop.permute.xlu0 %920
        %924 = vset.pattern.permute.xlu0 0
        %925 = vperm.xlu0 %924, %v855
        %v926 = vpop.permute.xlu0 %925
        %929 = vset.pattern.permute.xlu0 0
        %930 = vperm.xlu0 %929, %v856
        %v931 = vpop.permute.xlu0 %930
        %934 = vset.pattern.permute.xlu0 0
        %935 = vperm.xlu0 %934, %v857
        %v936 = vpop.permute.xlu0 %935
        %939 = vset.pattern.permute.xlu0 0
        %940 = vperm.xlu0 %939, %v858
        %v941 = vpop.permute.xlu0 %940
        %944 = vset.pattern.permute.xlu0 0
        %945 = vperm.xlu0 %944, %v859
        %v946 = vpop.permute.xlu0 %945
        %949 = vset.pattern.permute.xlu0 0
        %950 = vperm.xlu0 %949, %v860
        %v951 = vpop.permute.xlu0 %950
        %954 = vset.pattern.permute.xlu0 0
        %955 = vperm.xlu0 %954, %v861
        %v956 = vpop.permute.xlu0 %955
        %959 = vset.pattern.permute.xlu0 0
        %960 = vperm.xlu0 %959, %v862
        %v961 = vpop.permute.xlu0 %960
        %964 = vset.pattern.permute.xlu0 0
        %965 = vperm.xlu0 %964, %v863
        %v966 = vpop.permute.xlu0 %965
        %969 = vset.pattern.permute.xlu0 0
        %970 = vperm.xlu0 %969, %v864
        %v971 = vpop.permute.xlu0 %970
        %974 = vset.pattern.permute.xlu0 0
        %975 = vperm.xlu0 %974, %v865
        %v976 = vpop.permute.xlu0 %975
        %979 = vset.pattern.permute.xlu0 0
        %980 = vperm.xlu0 %979, %v866
        %v981 = vpop.permute.xlu0 %980
        %984 = vset.pattern.permute.xlu0 0
        %985 = vperm.xlu0 %984, %v867
        %v986 = vpop.permute.xlu0 %985
        %989 = vset.pattern.permute.xlu0 0
        %990 = vperm.xlu0 %989, %v868
        %v991 = vpop.permute.xlu0 %990
        %994 = vset.pattern.permute.xlu0 0
        %995 = vperm.xlu0 %994, %v869
        %v996 = vpop.permute.xlu0 %995
        %999 = vset.pattern.permute.xlu0 0
        %1000 = vperm.xlu0 %999, %v870
        %v1001 = vpop.permute.xlu0 %1000
        %1004 = vset.pattern.permute.xlu0 0
        %1005 = vperm.xlu0 %1004, %v871
        %v1006 = vpop.permute.xlu0 %1005
        %1009 = vset.pattern.permute.xlu0 0
        %1010 = vperm.xlu0 %1009, %v872
        %v1011 = vpop.permute.xlu0 %1010
        %1014 = vset.pattern.permute.xlu0 0
        %1015 = vperm.xlu0 %1014, %v873
        %v1016 = vpop.permute.xlu0 %1015
        %1019 = vset.pattern.permute.xlu0 0
        %1020 = vperm.xlu0 %1019, %v874
        %v1021 = vpop.permute.xlu0 %1020
        %1024 = vset.pattern.permute.xlu0 0
        %1025 = vperm.xlu0 %1024, %v875
        %v1026 = vpop.permute.xlu0 %1025
        %1029 = vset.pattern.permute.xlu0 0
        %1030 = vperm.xlu0 %1029, %v876
        %v1031 = vpop.permute.xlu0 %1030
        %1034 = vset.pattern.permute.xlu0 0
        %1035 = vperm.xlu0 %1034, %v877
        %v1036 = vpop.permute.xlu0 %1035
        %v1038 = vsub.f32 %v782, %v881
        %v1039 = vsub.f32 %v783, %v881
        %v1040 = vsub.f32 %v784, %v886
        %v1041 = vsub.f32 %v785, %v886
        %v1042 = vsub.f32 %v786, %v891
        %v1043 = vsub.f32 %v787, %v891
        %v1044 = vsub.f32 %v788, %v896
        %v1045 = vsub.f32 %v789, %v896
        %v1046 = vsub.f32 %v790, %v901
        %v1047 = vsub.f32 %v791, %v901
        %v1048 = vsub.f32 %v792, %v906
        %v1049 = vsub.f32 %v793, %v906
        %v1050 = vsub.f32 %v794, %v911
        %v1051 = vsub.f32 %v795, %v911
        %v1052 = vsub.f32 %v796, %v916
        %v1053 = vsub.f32 %v797, %v916
        %v1054 = vsub.f32 %v798, %v921
        %v1055 = vsub.f32 %v799, %v921
        %v1056 = vsub.f32 %v800, %v926
        %v1057 = vsub.f32 %v801, %v926
        %v1058 = vsub.f32 %v802, %v931
        %v1059 = vsub.f32 %v803, %v931
        %v1060 = vsub.f32 %v804, %v936
        %v1061 = vsub.f32 %v805, %v936
        %v1062 = vsub.f32 %v806, %v941
        %v1063 = vsub.f32 %v807, %v941
        %v1064 = vsub.f32 %v808, %v946
        %v1065 = vsub.f32 %v809, %v946
        %v1066 = vsub.f32 %v810, %v951
        %v1067 = vsub.f32 %v811, %v951
        %v1068 = vsub.f32 %v812, %v956
        %v1069 = vsub.f32 %v813, %v956
        %v1070 = vsub.f32 %v814, %v961
        %v1071 = vsub.f32 %v815, %v961
        %v1072 = vsub.f32 %v816, %v966
        %v1073 = vsub.f32 %v817, %v966
        %v1074 = vsub.f32 %v818, %v971
        %v1075 = vsub.f32 %v819, %v971
        %v1076 = vsub.f32 %v820, %v976
        %v1077 = vsub.f32 %v821, %v976
        %v1078 = vsub.f32 %v822, %v981
        %v1079 = vsub.f32 %v823, %v981
        %v1080 = vsub.f32 %v824, %v986
        %v1081 = vsub.f32 %v825, %v986
        %v1082 = vsub.f32 %v826, %v991
        %v1083 = vsub.f32 %v827, %v991
        %v1084 = vsub.f32 %v828, %v996
        %v1085 = vsub.f32 %v829, %v996
        %v1086 = vsub.f32 %v830, %v1001
        %v1087 = vsub.f32 %v831, %v1001
        %v1088 = vsub.f32 %v832, %v1006
        %v1089 = vsub.f32 %v833, %v1006
        %v1090 = vsub.f32 %v834, %v1011
        %v1091 = vsub.f32 %v835, %v1011
        %v1092 = vsub.f32 %v836, %v1016
        %v1093 = vsub.f32 %v837, %v1016
        %v1094 = vsub.f32 %v838, %v1021
        %v1095 = vsub.f32 %v839, %v1021
        %v1096 = vsub.f32 %v840, %v1026
        %v1097 = vsub.f32 %v841, %v1026
        %v1098 = vsub.f32 %v842, %v1031
        %v1099 = vsub.f32 %v843, %v1031
        %v1100 = vsub.f32 %v844, %v1036
        %v1101 = vsub.f32 %v845, %v1036
        %v1102 = vld [vmem:[#allocation2] sm:$0x3]
        %v1103 = vmax.f32 %v1038, %v1042
        %v1104 = vmax.f32 %v1040, %v1044
        %v1105 = vmax.f32 %v1103, %v1046
        %v1106 = vmax.f32 %v1104, %v1048
        %v1107 = vmax.f32 %v1105, %v1050
        %v1108 = vmax.f32 %v1106, %v1052
        %v1109 = vmax.f32 %v1107, %v1054
        %v1110 = vmax.f32 %v1108, %v1056
        %v1111 = vmax.f32 %v1109, %v1058
        %v1112 = vmax.f32 %v1110, %v1060
        %v1113 = vmax.f32 %v1111, %v1062
        %v1114 = vmax.f32 %v1112, %v1064
        %v1115 = vmax.f32 %v1113, %v1066
        %v1116 = vmax.f32 %v1114, %v1068
        %v1117 = vmax.f32 %v1115, %v1070
        %v1118 = vmax.f32 %v1116, %v1072
        %v1119 = vmax.f32 %v1117, %v1074
        %v1120 = vmax.f32 %v1118, %v1076
        %v1121 = vmax.f32 %v1119, %v1078
        %v1122 = vmax.f32 %v1120, %v1080
        %v1123 = vmax.f32 %v1121, %v1082
        %v1124 = vmax.f32 %v1122, %v1084
        %v1125 = vmax.f32 %v1123, %v1086
        %v1126 = vmax.f32 %v1124, %v1088
        %v1127 = vmax.f32 %v1125, %v1090
        %v1128 = vmax.f32 %v1126, %v1092
        %v1129 = vmax.f32 %v1127, %v1094
        %v1130 = vmax.f32 %v1128, %v1096
        %v1131 = vmax.f32 %v1129, %v1098
        %v1132 = vmax.f32 %v1130, %v1100
        %v1133 = vmax.f32 %v1131, %v1132
        %v1134 = vrot.slane %v1133, 4
        %v1135 = vmax.f32 %v1133, %v1134
        %v1136 = vrot.slane %v1135, 2
        %v1137 = vmax.f32 %v1135, %v1136
        %v1138 = vrot.slane %v1137, 1
        %v1139 = vmax.f32 %v1137, %v1138
        %v1140 = vmax.f32 %v1039, %v1043
        %v1141 = vmax.f32 %v1041, %v1045
        %v1142 = vmax.f32 %v1140, %v1047
        %v1143 = vmax.f32 %v1141, %v1049
        %v1144 = vmax.f32 %v1142, %v1051
        %v1145 = vmax.f32 %v1143, %v1053
        %v1146 = vmax.f32 %v1144, %v1055
        %v1147 = vmax.f32 %v1145, %v1057
        %v1148 = vmax.f32 %v1146, %v1059
        %v1149 = vmax.f32 %v1147, %v1061
        %v1150 = vmax.f32 %v1148, %v1063
        %v1151 = vmax.f32 %v1149, %v1065
        %v1152 = vmax.f32 %v1150, %v1067
        %v1153 = vmax.f32 %v1151, %v1069
        %v1154 = vmax.f32 %v1152, %v1071
        %v1155 = vmax.f32 %v1153, %v1073
        %v1156 = vmax.f32 %v1154, %v1075
        %v1157 = vmax.f32 %v1155, %v1077
        %v1158 = vmax.f32 %v1156, %v1079
        %v1159 = vmax.f32 %v1157, %v1081
        %v1160 = vmax.f32 %v1158, %v1083
        %v1161 = vmax.f32 %v1159, %v1085
        %v1162 = vmax.f32 %v1160, %v1087
        %v1163 = vmax.f32 %v1161, %v1089
        %v1164 = vmax.f32 %v1162, %v1091
        %v1165 = vmax.f32 %v1163, %v1093
        %v1166 = vmax.f32 %v1164, %v1095
        %v1167 = vmax.f32 %v1165, %v1097
        %v1168 = vmax.f32 %v1166, %v1099
        %v1169 = vmax.f32 %v1167, %v1101
        %v1170 = vmax.f32 %v1168, %v1169
        %v1171 = vrot.slane %v1170, 4
        %v1172 = vmax.f32 %v1170, %v1171
        %v1173 = vrot.slane %v1172, 2
        %v1174 = vmax.f32 %v1172, %v1173
        %v1175 = vrot.slane %v1174, 1
        %v1176 = vmax.f32 %v1174, %v1175
        %v1179 = vcombine.low %v1139, %v1176
        %v1181 = vunpack.c.l.s4 1966171168
        %v1182 = vunpack.c.0.s8 %v1181
        %v1183 = vlaneseq
        %v1184 = vshrl.u32 %v1183, 7
        %v1185 = vsub.s32 %v1182, %v1184
        %v1186 = vrot.slane %v1179, %v1185
        %v1188 = vunpack.c.l.s4 1966171168
        %v1189 = vunpack.c.0.s8 %v1188
        %v1190 = vlaneseq
        %v1191 = vshrl.u32 %v1190, 7
        %v1192 = vsub.s32 %v1189, %v1191
        %v1193 = vrot.slane %v1186, %v1192
        %v1195 = vmax.f32 %v1102, %v1193
        %v1196 = vsub.f32 %v1102, %v1195
        %v1197 = vmul.f32 %v1196, 1.442695
        %v1198 = vpow.pop %v1197
        %v1200 = vlaneseq
        %v1201 = vshrl.u32 %v1200, 7
        %v1202 = vsub.s32 0, %v1201
        %v1203 = vrot.slane %v1195, %v1202
        %v1204 = vlaneseq
        %v1205 = vshrl.u32 %v1204, 7
        %v1206 = vsub.s32 1, %v1205
        %v1207 = vrot.slane %v1195, %v1206
        %v1210 = vsub.f32 %v1038, %v1203
        %v1211 = vsub.f32 %v1039, %v1207
        %v1212 = vsub.f32 %v1040, %v1203
        %v1213 = vsub.f32 %v1041, %v1207
        %v1214 = vsub.f32 %v1042, %v1203
        %v1215 = vsub.f32 %v1043, %v1207
        %v1216 = vsub.f32 %v1044, %v1203
        %v1217 = vsub.f32 %v1045, %v1207
        %v1218 = vsub.f32 %v1046, %v1203
        %v1219 = vsub.f32 %v1047, %v1207
        %v1220 = vsub.f32 %v1048, %v1203
        %v1221 = vsub.f32 %v1049, %v1207
        %v1222 = vsub.f32 %v1050, %v1203
        %v1223 = vsub.f32 %v1051, %v1207
        %v1224 = vsub.f32 %v1052, %v1203
        %v1225 = vsub.f32 %v1053, %v1207
        %v1226 = vsub.f32 %v1054, %v1203
        %v1227 = vsub.f32 %v1055, %v1207
        %v1228 = vsub.f32 %v1056, %v1203
        %v1229 = vsub.f32 %v1057, %v1207
        %v1230 = vsub.f32 %v1058, %v1203
        %v1231 = vsub.f32 %v1059, %v1207
        %v1232 = vsub.f32 %v1060, %v1203
        %v1233 = vsub.f32 %v1061, %v1207
        %v1234 = vsub.f32 %v1062, %v1203
        %v1235 = vsub.f32 %v1063, %v1207
        %v1236 = vsub.f32 %v1064, %v1203
        %v1237 = vsub.f32 %v1065, %v1207
        %v1238 = vsub.f32 %v1066, %v1203
        %v1239 = vsub.f32 %v1067, %v1207
        %v1240 = vsub.f32 %v1068, %v1203
        %v1241 = vsub.f32 %v1069, %v1207
        %v1242 = vsub.f32 %v1070, %v1203
        %v1243 = vsub.f32 %v1071, %v1207
        %v1244 = vsub.f32 %v1072, %v1203
        %v1245 = vsub.f32 %v1073, %v1207
        %v1246 = vsub.f32 %v1074, %v1203
        %v1247 = vsub.f32 %v1075, %v1207
        %v1248 = vsub.f32 %v1076, %v1203
        %v1249 = vsub.f32 %v1077, %v1207
        %v1250 = vsub.f32 %v1078, %v1203
        %v1251 = vsub.f32 %v1079, %v1207
        %v1252 = vsub.f32 %v1080, %v1203
        %v1253 = vsub.f32 %v1081, %v1207
        %v1254 = vsub.f32 %v1082, %v1203
        %v1255 = vsub.f32 %v1083, %v1207
        %v1256 = vsub.f32 %v1084, %v1203
        %v1257 = vsub.f32 %v1085, %v1207
        %v1258 = vsub.f32 %v1086, %v1203
        %v1259 = vsub.f32 %v1087, %v1207
        %v1260 = vsub.f32 %v1088, %v1203
        %v1261 = vsub.f32 %v1089, %v1207
        %v1262 = vsub.f32 %v1090, %v1203
        %v1263 = vsub.f32 %v1091, %v1207
        %v1264 = vsub.f32 %v1092, %v1203
        %v1265 = vsub.f32 %v1093, %v1207
        %v1266 = vsub.f32 %v1094, %v1203
        %v1267 = vsub.f32 %v1095, %v1207
        %v1268 = vsub.f32 %v1096, %v1203
        %v1269 = vsub.f32 %v1097, %v1207
        %v1270 = vsub.f32 %v1098, %v1203
        %v1271 = vsub.f32 %v1099, %v1207
        %v1272 = vsub.f32 %v1100, %v1203
        %v1273 = vsub.f32 %v1101, %v1207
        %v1274 = vmul.f32 %v1210, 1.442695
        %v1275 = vpow.pop %v1274
        %v1276 = vmul.f32 %v1211, 1.442695
        %v1277 = vpow.pop %v1276
        %v1278 = vmul.f32 %v1212, 1.442695
        %v1279 = vpow.pop %v1278
        %v1280 = vmul.f32 %v1213, 1.442695
        %v1281 = vpow.pop %v1280
        %v1282 = vmul.f32 %v1214, 1.442695
        %v1283 = vpow.pop %v1282
        %v1284 = vmul.f32 %v1215, 1.442695
        %v1285 = vpow.pop %v1284
        %v1286 = vmul.f32 %v1216, 1.442695
        %v1287 = vpow.pop %v1286
        %v1288 = vmul.f32 %v1217, 1.442695
        %v1289 = vpow.pop %v1288
        %v1290 = vmul.f32 %v1218, 1.442695
        %v1291 = vpow.pop %v1290
        %v1292 = vmul.f32 %v1219, 1.442695
        %v1293 = vpow.pop %v1292
        %v1294 = vmul.f32 %v1220, 1.442695
        %v1295 = vpow.pop %v1294
        %v1296 = vmul.f32 %v1221, 1.442695
        %v1297 = vpow.pop %v1296
        %v1298 = vmul.f32 %v1222, 1.442695
        %v1299 = vpow.pop %v1298
        %v1300 = vmul.f32 %v1223, 1.442695
        %v1301 = vpow.pop %v1300
        %v1302 = vmul.f32 %v1224, 1.442695
        %v1303 = vpow.pop %v1302
        %v1304 = vmul.f32 %v1225, 1.442695
        %v1305 = vpow.pop %v1304
        %v1306 = vmul.f32 %v1226, 1.442695
        %v1307 = vpow.pop %v1306
        %v1308 = vmul.f32 %v1227, 1.442695
        %v1309 = vpow.pop %v1308
        %v1310 = vmul.f32 %v1228, 1.442695
        %v1311 = vpow.pop %v1310
        %v1312 = vmul.f32 %v1229, 1.442695
        %v1313 = vpow.pop %v1312
        %v1314 = vmul.f32 %v1230, 1.442695
        %v1315 = vpow.pop %v1314
        %v1316 = vmul.f32 %v1231, 1.442695
        %v1317 = vpow.pop %v1316
        %v1318 = vmul.f32 %v1232, 1.442695
        %v1319 = vpow.pop %v1318
        %v1320 = vmul.f32 %v1233, 1.442695
        %v1321 = vpow.pop %v1320
        %v1322 = vmul.f32 %v1234, 1.442695
        %v1323 = vpow.pop %v1322
        %v1324 = vmul.f32 %v1235, 1.442695
        %v1325 = vpow.pop %v1324
        %v1326 = vmul.f32 %v1236, 1.442695
        %v1327 = vpow.pop %v1326
        %v1328 = vmul.f32 %v1237, 1.442695
        %v1329 = vpow.pop %v1328
        %v1330 = vmul.f32 %v1238, 1.442695
        %v1331 = vpow.pop %v1330
        %v1332 = vmul.f32 %v1239, 1.442695
        %v1333 = vpow.pop %v1332
        %v1334 = vmul.f32 %v1240, 1.442695
        %v1335 = vpow.pop %v1334
        %v1336 = vmul.f32 %v1241, 1.442695
        %v1337 = vpow.pop %v1336
        %v1338 = vmul.f32 %v1242, 1.442695
        %v1339 = vpow.pop %v1338
        %v1340 = vmul.f32 %v1243, 1.442695
        %v1341 = vpow.pop %v1340
        %v1342 = vmul.f32 %v1244, 1.442695
        %v1343 = vpow.pop %v1342
        %v1344 = vmul.f32 %v1245, 1.442695
        %v1345 = vpow.pop %v1344
        %v1346 = vmul.f32 %v1246, 1.442695
        %v1347 = vpow.pop %v1346
        %v1348 = vmul.f32 %v1247, 1.442695
        %v1349 = vpow.pop %v1348
        %v1350 = vmul.f32 %v1248, 1.442695
        %v1351 = vpow.pop %v1350
        %v1352 = vmul.f32 %v1249, 1.442695
        %v1353 = vpow.pop %v1352
        %v1354 = vmul.f32 %v1250, 1.442695
        %v1355 = vpow.pop %v1354
        %v1356 = vmul.f32 %v1251, 1.442695
        %v1357 = vpow.pop %v1356
        %v1358 = vmul.f32 %v1252, 1.442695
        %v1359 = vpow.pop %v1358
        %v1360 = vmul.f32 %v1253, 1.442695
        %v1361 = vpow.pop %v1360
        %v1362 = vmul.f32 %v1254, 1.442695
        %v1363 = vpow.pop %v1362
        %v1364 = vmul.f32 %v1255, 1.442695
        %v1365 = vpow.pop %v1364
        %v1366 = vmul.f32 %v1256, 1.442695
        %v1367 = vpow.pop %v1366
        %v1368 = vmul.f32 %v1257, 1.442695
        %v1369 = vpow.pop %v1368
        %v1370 = vmul.f32 %v1258, 1.442695
        %v1371 = vpow.pop %v1370
        %v1372 = vmul.f32 %v1259, 1.442695
        %v1373 = vpow.pop %v1372
        %v1374 = vmul.f32 %v1260, 1.442695
        %v1375 = vpow.pop %v1374
        %v1376 = vmul.f32 %v1261, 1.442695
        %v1377 = vpow.pop %v1376
        %v1378 = vmul.f32 %v1262, 1.442695
        %v1379 = vpow.pop %v1378
        %v1380 = vmul.f32 %v1263, 1.442695
        %v1381 = vpow.pop %v1380
        %v1382 = vmul.f32 %v1264, 1.442695
        %v1383 = vpow.pop %v1382
        %v1384 = vmul.f32 %v1265, 1.442695
        %v1385 = vpow.pop %v1384
        %v1386 = vmul.f32 %v1266, 1.442695
        %v1387 = vpow.pop %v1386
        %v1388 = vmul.f32 %v1267, 1.442695
        %v1389 = vpow.pop %v1388
        %v1390 = vmul.f32 %v1268, 1.442695
        %v1391 = vpow.pop %v1390
        %v1392 = vmul.f32 %v1269, 1.442695
        %v1393 = vpow.pop %v1392
        %v1394 = vmul.f32 %v1270, 1.442695
        %v1395 = vpow.pop %v1394
        %v1396 = vmul.f32 %v1271, 1.442695
        %v1397 = vpow.pop %v1396
        %v1398 = vmul.f32 %v1272, 1.442695
        %v1399 = vpow.pop %v1398
        %v1400 = vmul.f32 %v1273, 1.442695
        %v1401 = vpow.pop %v1400
        %v1402 = vld [vmem:[#allocation3] sm:$0x3]
        %v1403 = vmul.f32 %v1198, %v1402
        %v1404 = vadd.f32 %v1275, %v1279
        %v1405 = vadd.f32 %v1404, %v1283
        %v1406 = vadd.f32 %v1405, %v1287
        %v1407 = vadd.f32 %v1406, %v1291
        %v1408 = vadd.f32 %v1407, %v1295
        %v1409 = vadd.f32 %v1408, %v1299
        %v1410 = vadd.f32 %v1409, %v1303
        %v1411 = vadd.f32 %v1410, %v1307
        %v1412 = vadd.f32 %v1411, %v1311
        %v1413 = vadd.f32 %v1412, %v1315
        %v1414 = vadd.f32 %v1413, %v1319
        %v1415 = vadd.f32 %v1414, %v1323
        %v1416 = vadd.f32 %v1415, %v1327
        %v1417 = vadd.f32 %v1416, %v1331
        %v1418 = vadd.f32 %v1417, %v1335
        %v1419 = vadd.f32 %v1418, %v1339
        %v1420 = vadd.f32 %v1419, %v1343
        %v1421 = vadd.f32 %v1420, %v1347
        %v1422 = vadd.f32 %v1421, %v1351
        %v1423 = vadd.f32 %v1422, %v1355
        %v1424 = vadd.f32 %v1423, %v1359
        %v1425 = vadd.f32 %v1424, %v1363
        %v1426 = vadd.f32 %v1425, %v1367
        %v1427 = vadd.f32 %v1426, %v1371
        %v1428 = vadd.f32 %v1427, %v1375
        %v1429 = vadd.f32 %v1428, %v1379
        %v1430 = vadd.f32 %v1429, %v1383
        %v1431 = vadd.f32 %v1430, %v1387
        %v1432 = vadd.f32 %v1431, %v1391
        %v1433 = vadd.f32 %v1432, %v1395
        %v1434 = vadd.f32 %v1433, %v1399
        %v1435 = vrot.slane %v1434, 4
        %v1436 = vadd.f32 %v1434, %v1435
        %v1437 = vrot.slane %v1436, 2
        %v1438 = vadd.f32 %v1436, %v1437
        %v1439 = vrot.slane %v1438, 1
        %v1440 = vadd.f32 %v1438, %v1439
        %v1441 = vadd.f32 %v1277, %v1281
        %v1442 = vadd.f32 %v1441, %v1285
        %v1443 = vadd.f32 %v1442, %v1289
        %v1444 = vadd.f32 %v1443, %v1293
        %v1445 = vadd.f32 %v1444, %v1297
        %v1446 = vadd.f32 %v1445, %v1301
        %v1447 = vadd.f32 %v1446, %v1305
        %v1448 = vadd.f32 %v1447, %v1309
        %v1449 = vadd.f32 %v1448, %v1313
        %v1450 = vadd.f32 %v1449, %v1317
        %v1451 = vadd.f32 %v1450, %v1321
        %v1452 = vadd.f32 %v1451, %v1325
        %v1453 = vadd.f32 %v1452, %v1329
        %v1454 = vadd.f32 %v1453, %v1333
        %v1455 = vadd.f32 %v1454, %v1337
        %v1456 = vadd.f32 %v1455, %v1341
        %v1457 = vadd.f32 %v1456, %v1345
        %v1458 = vadd.f32 %v1457, %v1349
        %v1459 = vadd.f32 %v1458, %v1353
        %v1460 = vadd.f32 %v1459, %v1357
        %v1461 = vadd.f32 %v1460, %v1361
        %v1462 = vadd.f32 %v1461, %v1365
        %v1463 = vadd.f32 %v1462, %v1369
        %v1464 = vadd.f32 %v1463, %v1373
        %v1465 = vadd.f32 %v1464, %v1377
        %v1466 = vadd.f32 %v1465, %v1381
        %v1467 = vadd.f32 %v1466, %v1385
        %v1468 = vadd.f32 %v1467, %v1389
        %v1469 = vadd.f32 %v1468, %v1393
        %v1470 = vadd.f32 %v1469, %v1397
        %v1471 = vadd.f32 %v1470, %v1401
        %v1472 = vrot.slane %v1471, 4
        %v1473 = vadd.f32 %v1471, %v1472
        %v1474 = vrot.slane %v1473, 2
        %v1475 = vadd.f32 %v1473, %v1474
        %v1476 = vrot.slane %v1475, 1
        %v1477 = vadd.f32 %v1475, %v1476
        %v1480 = vcombine.low %v1440, %v1477
        %v1482 = vunpack.c.l.s4 1966171168
        %v1483 = vunpack.c.0.s8 %v1482
        %v1484 = vlaneseq
        %v1485 = vshrl.u32 %v1484, 7
        %v1486 = vsub.s32 %v1483, %v1485
        %v1487 = vrot.slane %v1480, %v1486
        %v1489 = vunpack.c.l.s4 1966171168
        %v1490 = vunpack.c.0.s8 %v1489
        %v1491 = vlaneseq
        %v1492 = vshrl.u32 %v1491, 7
        %v1493 = vsub.s32 %v1490, %v1492
        %v1494 = vrot.slane %v1487, %v1493
        %v1496 = vadd.f32 %v1403, %v1494
        %v1497 = vlaneseq
        %vm1498 = vcmp.ge.s32.totalorder %v1497, 0
        %vm1499 = vcmp.lt.s32.totalorder %v1497, 256
        %vm1500 = vmand %vm1498, %vm1499
        %1501 = vst.msk [vmem:[#allocation3] sm:$0x3] %vm1500, %v1496
        %s1502 = smul.u32 %s25, 2
        %s1503 = smul.addr %s1502, 4
        %s1504 = scalar_lea.vmem %s324, %s1503
        %v1505 = vld [vmem:[%s1504] sm:$0xff]
        %v1506 = vld [vmem:[#allocation4] sm:$0xff]
        %v1508 = vlaneseq
        %v1509 = vshrl.u32 %v1508, 7
        %v1510 = vsub.s32 0, %v1509
        %v1511 = vrot.slane %v1198, %v1510
        %v1512 = vlaneseq
        %v1513 = vshrl.u32 %v1512, 7
        %v1514 = vsub.s32 1, %v1513
        %v1515 = vrot.slane %v1198, %v1514
        %v1519 = vcombine.high %v1506, %v1506
        %v1521 = vmul.f32 %v1511, %v1506
        %v1522 = vmul.f32 %v1515, %v1519
        %v1524 = vcombine.high %v1505, %v1505
        %1526 = vmatprep.subr.mxu0 %v1277
        %1527 = vmatpush1.msra.mxu0 %v1275
        %1528 = vmatprep.subr.mxu0 %v1281
        %1529 = vmatpush1.msra.mxu0 %v1279
        %1530 = vmatprep.subr.mxu0 %v1285
        %1531 = vmatpush1.msra.mxu0 %v1283
        %1532 = vmatprep.subr.mxu0 %v1289
        %1533 = vmatpush1.msra.mxu0 %v1287
        %1534 = vmatprep.subr.mxu0 %v1293
        %1535 = vmatpush1.msra.mxu0 %v1291
        %1536 = vmatprep.subr.mxu0 %v1297
        %1537 = vmatpush1.msra.mxu0 %v1295
        %1538 = vmatprep.subr.mxu0 %v1301
        %1539 = vmatpush1.msra.mxu0 %v1299
        %1540 = vmatprep.subr.mxu0 %v1305
        %1541 = vmatpush1.msra.mxu0 %v1303
        %1542 = vmatprep.subr.mxu0 %v1309
        %1543 = vmatpush1.msra.mxu0 %v1307
        %1544 = vmatprep.subr.mxu0 %v1313
        %1545 = vmatpush1.msra.mxu0 %v1311
        %1546 = vmatprep.subr.mxu0 %v1317
        %1547 = vmatpush1.msra.mxu0 %v1315
        %1548 = vmatprep.subr.mxu0 %v1321
        %1549 = vmatpush1.msra.mxu0 %v1319
        %1550 = vmatprep.subr.mxu0 %v1325
        %1551 = vmatpush1.msra.mxu0 %v1323
        %1552 = vmatprep.subr.mxu0 %v1329
        %1553 = vmatpush1.msra.mxu0 %v1327
        %1554 = vmatprep.subr.mxu0 %v1333
        %1555 = vmatpush1.msra.mxu0 %v1331
        %1556 = vmatprep.subr.mxu0 %v1337
        %1557 = vmatpush1.msra.mxu0 %v1335
        %1558 = vmatprep.subr.mxu0 %v1341
        %1559 = vmatpush1.msra.mxu0 %v1339
        %1560 = vmatprep.subr.mxu0 %v1345
        %1561 = vmatpush1.msra.mxu0 %v1343
        %1562 = vmatprep.subr.mxu0 %v1349
        %1563 = vmatpush1.msra.mxu0 %v1347
        %1564 = vmatprep.subr.mxu0 %v1353
        %1565 = vmatpush1.msra.mxu0 %v1351
        %1566 = vmatprep.subr.mxu0 %v1357
        %1567 = vmatpush1.msra.mxu0 %v1355
        %1568 = vmatprep.subr.mxu0 %v1361
        %1569 = vmatpush1.msra.mxu0 %v1359
        %1570 = vmatprep.subr.mxu0 %v1365
        %1571 = vmatpush1.msra.mxu0 %v1363
        %1572 = vmatprep.subr.mxu0 %v1369
        %1573 = vmatpush1.msra.mxu0 %v1367
        %1574 = vmatprep.subr.mxu0 %v1373
        %1575 = vmatpush1.msra.mxu0 %v1371
        %1576 = vmatprep.subr.mxu0 %v1377
        %1577 = vmatpush1.msra.mxu0 %v1375
        %1578 = vmatprep.subr.mxu0 %v1381
        %1579 = vmatpush1.msra.mxu0 %v1379
        %1580 = vmatprep.subr.mxu0 %v1385
        %1581 = vmatpush1.msra.mxu0 %v1383
        %1582 = vmatprep.subr.mxu0 %v1389
        %1583 = vmatpush1.msra.mxu0 %v1387
        %1584 = vmatprep.subr.mxu0 %v1393
        %1585 = vmatpush1.msra.mxu0 %v1391
        %1586 = vmatprep.subr.mxu0 %v1397
        %1587 = vmatpush1.msra.mxu0 %v1395
        %1588 = vmatprep.subr.mxu0 %v1401
        %1589 = vmatpush1.msra.mxu0 %v1399
        %1590 = vmatprep.mubr.f32.mxu0 %v1524
        %1591 = vmatmul.mubr.f32.gmra.mrb[0].mxu0 %v1505
        %v1592 = vpop.f32.mrb[0].mxu0
        %v1593 = vadd.f32 0.0, %v1592
        %v1594 = vpop.f32.mrb[0].mxu0
        %v1595 = vadd.f32 0.0, %v1594
        %1596 = vdwg.mxu0
        %v1597 = vadd.f32 %v1521, %v1593
        %v1598 = vadd.f32 %v1522, %v1595
        %v1601 = vcombine.low %v1597, %v1598
        %1603 = vst [vmem:[#allocation4] sm:$0xff] %v1601
        %1604 = vst.msk [vmem:[#allocation2] sm:$0x3] %vm1500, %v1195
        // Predicated region
        $region41: #{tpu_custom_call.1} parent=35 // pred_check
          %p1605 = pneg %p326
        $region42: #{tpu_custom_call.1} parent=35 // pred_check_branch
          %1607 = sbr.rel (%p1605) target = $region44
        $region43: #{tpu_custom_call.1} parent=35 // pred_region
          %v1608 = vld [vmem:[#allocation3] sm:$0x3]
          %v1609 = vrcp.pop %v1608
          %v1610 = vmul.f32 %v1608, %v1609
          %v1611 = vsub.f32 2.0, %v1610
          %v1612 = vmul.f32 %v1609, %v1611
          %v1613 = vld [vmem:[#allocation4] sm:$0xff]
          %v1615 = vlaneseq
          %v1616 = vshrl.u32 %v1615, 7
          %v1617 = vsub.s32 0, %v1616
          %v1618 = vrot.slane %v1612, %v1617
          %v1619 = vlaneseq
          %v1620 = vshrl.u32 %v1619, 7
          %v1621 = vsub.s32 1, %v1620
          %v1622 = vrot.slane %v1612, %v1621
          %v1623 = vcombine.low %v1618, %v1622
          %v1625 = vmul.f32 %v1613, %v1623
          %1626 = vst [vmem:[%s289] sm:$0xff] %v1625
        $region44: #{tpu_custom_call.1} parent=35 // pred_fallthru
          _
        %s1627 = sand.u32 %s157, 1
        %s1628 = scalar_lea.sflag [#allocation6], %s1627
        %s1629 = sand.u32 %s157, 1
        %s1630 = smul.addr %s1629, 8
        %s1631 = scalar_lea.vmem [#allocation5], %s1630
        // Predicated region
        $region45: #{tpu_custom_call.1} parent=35 // pred_check
          %p1632 = pneg %p167
        $region46: #{tpu_custom_call.1} parent=35 // pred_check_branch
          %1634 = sbr.rel (%p1632) target = $region48
        $region47: #{tpu_custom_call.1} parent=35 // pred_region
          %s1635 = smul.u32 2, %s24
          %s1637 = ssub.s32 128, 128
          %1638 = vsyncadd %s1628, %s1637
          %s1639 = smul.addr %s23, 2
          %s1640 = sadd.s32 %s1635, %s1639
          %s1641 = smul.addr %s1640, 64
          %s1642 = scalar_lea.hbm %s4, %s1641
          %s1644 = sshll.u32 %s1631, 4
          %s1645 = int_to_ptr.vmem [resolvable:$true] %s1644
          %1647 = dma.vmem_to_hbm [thread:$0]  %s1645, 128, %s1642, %s1628
        $region48: #{tpu_custom_call.1} parent=35 // pred_fallthru
          _
      $region36: #{tpu_custom_call.1} parent=5 // pred_fallthru
        _
      %p1648 = scmp.le.s32.totalorder 2, %s13
      // Predicated region
      $region49: #{tpu_custom_call.1} parent=5 // pred_check
        %p1649 = pneg %p1648
      $region50: #{tpu_custom_call.1} parent=5 // pred_check_branch
        %1651 = sbr.rel (%p1649) target = $region52
      $region51: #{tpu_custom_call.1} parent=5 // pred_region
        %s1652 = ssub.s32 %s13, 2
        // Predicated region
        $region53: #{tpu_custom_call.1} parent=51 // pred_check
          %p1653 = pneg %p173
        $region54: #{tpu_custom_call.1} parent=51 // pred_check_branch
          %1655 = sbr.rel (%p1653) target = $region56
        $region55: #{tpu_custom_call.1} parent=51 // pred_region
          %s1656 = sand.u32 %s158, 1
          %s1657 = scalar_lea.sflag [#allocation6], %s1656
          %s1658 = sand.u32 %s158, 1
          %s1659 = smul.addr %s1658, 8
          %s1660 = scalar_lea.vmem [#allocation5], %s1659
          %1661 = dma.done %s1657, 128
        $region56: #{tpu_custom_call.1} parent=51 // pred_fallthru
          _
      $region52: #{tpu_custom_call.1} parent=5 // pred_fallthru
        _
    $region6: #{tpu_custom_call.1} parent=1 // loop_footer
      %s17 = sadd.s32 1, %s13
    $region7: #{tpu_custom_call.1} parent=1 // loop_footer_branch
      %12 = sbr.rel target = $region3
    $region8: #{tpu_custom_call.1} parent=1 // loop_exit
      _
    %1662 = vsyncpa [#allocation6], 1
    %s1663 = scalar_lea.sflag [#allocation6], 1
    %1664 = vsyncpa %s1663, 1

</llo_original>
